<compile_context>
chip_gen: v7x
topology: tpu7x:2x2x1
jax: 0.10.0
libtpu: 0.0.40
codegen_flags: <defaults>
</compile_context>

<pallas_src>
import numpy as np
import jax
import jax.numpy as jnp
from jax import lax
from jax.experimental import pallas as pl
from jax.experimental.pallas import tpu as pltpu

# ---------------- synthetic obsConstants (small, self-consistent) ----------------
numDrones = 2
wallTypes = 4
weaponTypes = 5
mapObsRows = 16
mapObsColumns = 16
mapObsSize = mapObsRows * mapObsColumns              # packed bytes, 4 sub-obs per byte

numNearWallObs = 2;   nearWallPosObsSize = 2
numFloatingWallObs = 2;   floatingWallInfoObsSize = 3
numWeaponPickupObs = 2;   weaponPickupPosObsSize = 2
numProjectileObs = 2;   projectileInfoObsSize = 3
enemyDroneObsSize = 4
droneObsSize = 5
miscObsSize = 2

weaponTypeEmbeddingDims = 2
cnnChannels = 64
encoderOutputSize = 256
lstmOutputSize = 256
actionDim = 4                                        # env.single_action_space.shape[0]

numMultihotObs = numNearWallObs + numFloatingWallObs + numProjectileObs          # 6
numWeaponTypeObs = numWeaponPickupObs + numProjectileObs + (numDrones - 1) + 1   # 6
continuousObsSize = (numNearWallObs * nearWallPosObsSize
                     + numFloatingWallObs * floatingWallInfoObsSize
                     + numWeaponPickupObs * weaponPickupPosObsSize
                     + numProjectileObs * projectileInfoObsSize
                     + (numDrones - 1) * enemyDroneObsSize
                     + droneObsSize + miscObsSize)                               # 31
continuousObsBytes = 4 * continuousObsSize                                       # 124

nearWallTypesObsOffset = mapObsSize                                              # 256
projectileTypesObsOffset = nearWallTypesObsOffset + numMultihotObs               # 262
discreteObsSize = projectileTypesObsOffset + numWeaponTypeObs                    # 268
continuousObsOffset = discreteObsSize
obsSize = continuousObsOffset + continuousObsBytes                               # 392

mapObsInputChannels = wallTypes + 1 + 1 + 1 + numDrones                          # 9

discreteFactors = np.array([wallTypes] * numNearWallObs
                           + [wallTypes + 1] * numFloatingWallObs
                           + [numDrones + 1] * numProjectileObs)
discreteOffsets = np.concatenate([[0], np.cumsum(discreteFactors)[:-1]]).astype(np.int32)
discreteMultihotDim = int(discreteFactors.sum())                                 # 24

conv1Out = (mapObsRows - 5) // 3 + 1                                             # 4
conv2Out = conv1Out - 3 + 1                                                      # 2
cnnOutputSize = cnnChannels * conv2Out * conv2Out                                # 256
featuresSize = (cnnOutputSize + discreteMultihotDim
                + numWeaponTypeObs * weaponTypeEmbeddingDims + continuousObsSize)  # 323

# ---------------- padded sizes used by the fused kernel ----------------
CONV1_POS = conv1Out * conv1Out              # 16 conv1 output positions
CONV1_K = 5 * 5 * mapObsInputChannels        # 225 (im2col patch length for conv1)
CONV1_K_PAD = 256                            # zero-padded to a lane multiple
SPATIAL2 = conv2Out * conv2Out               # 4 conv2 output positions
CONV2_K = 9 * cnnChannels                    # 576 (all 9 taps lane-concatenated)
CONV2_K_PAD = 640                            # lane-aligned K for the single conv2 matmul
extraFeatSize = (discreteMultihotDim
                 + numWeaponTypeObs * weaponTypeEmbeddingDims
                 + continuousObsSize)        # 67 non-CNN features
EXTRA_PAD = 128                              # zero-padded lane width for extras
ENC_K = cnnOutputSize + EXTRA_PAD            # 384 encoder lhs width (map 256 + extras 128)
HEAD_PAD = 128                               # output slab: cols 0:4 mean, col 4 value

DEFAULT_TB = 128   # batch tile rows; TODO(synk): drop to 64 on v5e after measuring


# ---------------- fused Pallas kernel (one batch tile per grid step) ----------------
def _policy_fused_kernel(p1_ref, w1_ref, b1_ref, w2_ref, b2_ref,
                         extras_ref, encw_ref, encb_ref, hw_ref, hb_ref, out_ref):
    TB = out_ref.shape[0]                       # batch-tile rows (multiple of 16)

    # ---- conv1 (5x5, stride 3): one im2col matmul over all 16 output positions ----
    # p1 rows ordered (position p = h*4 + w, batch b within the tile)
    y1 = jnp.dot(p1_ref[0], w1_ref[...], preferred_element_type=jnp.float32)
    y1 = jnp.maximum(y1 + b1_ref[...], 0.0)                 # (16*TB, 64) f32
    y1 = y1.astype(jnp.bfloat16)                            # single bf16 cast after ReLU

    # ---- conv2 (3x3, stride 1) as ONE wide-K matmul ----
    # lane-concatenate the 9 tap views (rows ordered (s = oi*2 + oj, b)); K padded 576->640
    taps = []
    for di in range(3):
        for dj in range(3):
            rows = [y1[((oi + di) * conv1Out + dj) * TB:
                       ((oi + di) * conv1Out + dj + conv2Out) * TB, :]
                    for oi in range(conv2Out)]
            taps.append(jnp.concatenate(rows, axis=0))      # (4*TB, 64)
    taps.append(jnp.zeros((SPATIAL2 * TB, cnnChannels), jnp.bfloat16))   # K pad to 640
    lhs2 = jnp.concatenate(taps, axis=-1)                    # (4*TB, 640) bf16
    y2 = jnp.dot(lhs2, w2_ref[...], preferred_element_type=jnp.float32)
    y2 = jnp.maximum(y2 + b2_ref[...], 0.0).astype(jnp.bfloat16)         # (4*TB, 64)

    # ---- encoder: ONE (TB, 384) @ (384, 256) matmul ----
    # map_feat lane s*64 + c matches encw row ordering (torch NCHW Flatten folded in).
    map_feat = jnp.concatenate(
        [y2[s * TB:(s + 1) * TB, :] for s in range(SPATIAL2)], axis=-1)  # (TB, 256)
    enc_lhs = jnp.concatenate([map_feat, extras_ref[...]], axis=-1)      # (TB, 384) bf16
    h = jnp.dot(enc_lhs, encw_ref[...], preferred_element_type=jnp.float32)
    h = jnp.maximum(h + encb_ref[...], 0.0)                              # (TB, 256) f32

    # ---- fused actor-mean + critic head, lane-dense (TB, 128) output slab ----
    out_ref[...] = (jnp.dot(h.astype(jnp.bfloat16), hw_ref[...],
                            preferred_element_type=jnp.float32) + hb_ref[...])


def _fused_forward(p1_tiled, extras, kp):
    nT, rows, _ = p1_tiled.shape
    TB = rows // CONV1_POS
    BP = nT * TB

    flops = 2 * BP * (CONV1_POS * CONV1_K_PAD * cnnChannels
                      + SPATIAL2 * CONV2_K_PAD * cnnChannels
                      + ENC_K * encoderOutputSize
                      + encoderOutputSize * HEAD_PAD)
    weight_bytes = sum(int(np.prod(kp[k].shape)) * kp[k].dtype.itemsize
                       for k in ('w1', 'b1', 'w2', 'b2', 'encw', 'encb', 'hw', 'hb'))
    bytes_accessed = (p1_tiled.size * p1_tiled.dtype.itemsize
                      + extras.size * extras.dtype.itemsize
                      + BP * HEAD_PAD * 4 + weight_bytes)
    cost = pl.CostEstimate(flops=flops, transcendentals=0, bytes_accessed=bytes_accessed)

    return pl.pallas_call(
        _policy_fused_kernel,
        out_shape=jax.ShapeDtypeStruct((BP, HEAD_PAD), jnp.float32),
        grid=(nT,),
        in_specs=[
            pl.BlockSpec((1, CONV1_POS * TB, CONV1_K_PAD), lambda i: (i, 0, 0)),  # p1 tile
            pl.BlockSpec(kp['w1'].shape, lambda i: (0, 0)),
            pl.BlockSpec(kp['b1'].shape, lambda i: (0, 0)),
            pl.BlockSpec(kp['w2'].shape, lambda i: (0, 0)),
            pl.BlockSpec(kp['b2'].shape, lambda i: (0, 0)),
            pl.BlockSpec((TB, EXTRA_PAD), lambda i: (i, 0)),                      # extras tile
            pl.BlockSpec(kp['encw'].shape, lambda i: (0, 0)),
            pl.BlockSpec(kp['encb'].shape, lambda i: (0, 0)),
            pl.BlockSpec(kp['hw'].shape, lambda i: (0, 0)),
            pl.BlockSpec(kp['hb'].shape, lambda i: (0, 0)),
        ],
        out_specs=pl.BlockSpec((TB, HEAD_PAD), lambda i: (i, 0)),
        compiler_params=pltpu.CompilerParams(
            dimension_semantics=("parallel",),            # megacore on v7x
            vmem_limit_bytes=32 * 1024 * 1024),           # ample headroom, fits all chips
        cost_estimate=cost,
    )(p1_tiled, kp['w1'], kp['b1'], kp['w2'], kp['b2'], extras,
      kp['encw'], kp['encb'], kp['hw'], kp['hb'])


# ---------------- JAX glue ----------------
def _batch_tiles(B):
    if B >= DEFAULT_TB:
        TB = DEFAULT_TB
    else:
        TB = max(16, -(-B // 16) * 16)       # multiple of 16 keeps bf16 sublane tiles clean
    BP = -(-B // TB) * TB
    return TB, BP


def unpack_map(obs_u8, B):
    mask = jnp.array([96, 16, 8, 7], dtype=jnp.uint8)
    shift = jnp.array([5, 4, 3, 0], dtype=jnp.uint8)
    m = obs_u8[:, :mapObsSize][:, :, None]
    m = (m & mask) >> shift                                   # (B, mapObsSize, 4)
    return jnp.transpose(m, (0, 2, 1)).reshape(B, 4, mapObsRows, mapObsColumns)


def policy_forward(kparams, obs_u8, noise):
    B = obs_u8.shape[0]
    TB, BP = _batch_tiles(B)

    mp = unpack_map(obs_u8, B)                                # (B, 4, R, C) uint8

    # NOTE: the drone field is 3 bits wide but only numDrones=2 classes are one-hot encoded,
    # matching the torch module; out-of-range values would silently produce a zero row.
    wall = jax.nn.one_hot(mp[:, 0].astype(jnp.int32), wallTypes + 1, dtype=jnp.bfloat16)
    floating = mp[:, 1].astype(jnp.bfloat16)[..., None]
    pickup = mp[:, 2].astype(jnp.bfloat16)[..., None]
    drone = jax.nn.one_hot(mp[:, 3].astype(jnp.int32), numDrones, dtype=jnp.bfloat16)
    map_nhwc = jnp.concatenate([wall, floating, pickup, drone], axis=-1)   # (B, R, C, 9)
    map_nhwc = jnp.pad(map_nhwc, ((0, BP - B), (0, 0), (0, 0), (0, 0)))    # zero batch pad

    # conv1 im2col: per-position patch rows, batch-tiled layout (nT, 16*TB, 256), bf16 exact
    patches = []
    for i in range(conv1Out):
        for j in range(conv1Out):
            patches.append(
                map_nhwc[:, 3 * i:3 * i + 5, 3 * j:3 * j + 5, :].reshape(BP, CONV1_K))
    p1 = jnp.stack(patches, axis=0)                              # (16, BP, 225) bf16
    p1 = jnp.pad(p1, ((0, 0), (0, 0), (0, CONV1_K_PAD - CONV1_K)))
    nT = BP // TB
    p1 = p1.reshape(CONV1_POS, nT, TB, CONV1_K_PAD).transpose(1, 0, 2, 3)
    p1 = p1.reshape(nT, CONV1_POS * TB, CONV1_K_PAD)             # rows (p, b) per tile

    # multihot scatter (scatter_ of ones)
    mh_idx = (obs_u8[:, nearWallTypesObsOffset:projectileTypesObsOffset].astype(jnp.int32)
              + jnp.asarray(discreteOffsets)[None, :])
    multihot = jnp.zeros((B, discreteMultihotDim), jnp.float32).at[
        jnp.arange(B)[:, None], mh_idx].set(1.0)

    # weapon-type embedding
    w_idx = obs_u8[:, projectileTypesObsOffset:discreteObsSize].astype(jnp.int32)
    wemb = kparams['weapon_emb'][w_idx].reshape(B, -1)           # (B, 12)

    # continuous obs: reinterpret uint8 bytes as float32 (nativize_tensor)
    cbytes = obs_u8[:, continuousObsOffset:].reshape(B, continuousObsSize, 4)
    cont = lax.bitcast_convert_type(cbytes, jnp.float32)         # (B, 31)

    extras = jnp.concatenate([multihot, wemb, cont], axis=-1).astype(jnp.bfloat16)
    extras = jnp.pad(extras, ((0, BP - B), (0, EXTRA_PAD - extraFeatSize)))   # (BP, 128)

    out = _fused_forward(p1, extras, kparams)                    # (BP, 128) f32
    mean = out[:B, :actionDim] + noise                           # noise added outside kernel
    value = out[:B, actionDim:actionDim + 1]                     # critic value
    # std is batch-independent: exp(logStd) computed outside the kernel (free on VPU).
    std = jnp.broadcast_to(jnp.exp(kparams['actor_logstd']), (B, actionDim))
    # torch returns (Normal(mean, std), value); we return the distribution parameters.
    return (mean, std), value


# ---------------- deterministic parameter init (torch-layout) + kernel packing ----------------
def init_params(key):
    ks = jax.random.split(key, 6)

    def lin_init(k, shape, std):
        # TODO(synk): deterministic scaled-normal stand-in for torch orthogonal layer_init
        return (std / np.sqrt(shape[0])) * jax.random.normal(k, shape, jnp.float32)

    return dict(
        conv1_w=lin_init(ks[0], (CONV1_K, cnnChannels), np.sqrt(2)),          # (kh,kw,cin)-flat
        conv1_b=jnp.zeros((1, cnnChannels), jnp.float32),
        conv2_w=lin_init(ks[1], (CONV2_K, cnnChannels), np.sqrt(2)),          # (kh,kw,cin)-flat
        conv2_b=jnp.zeros((1, cnnChannels), jnp.float32),
        weapon_emb=jax.random.normal(ks[2], (weaponTypes, weaponTypeEmbeddingDims), jnp.float32),
        enc_w=lin_init(ks[3], (featuresSize, encoderOutputSize), np.sqrt(2)),
        enc_b=jnp.zeros((1, encoderOutputSize), jnp.float32),
        actor_w=lin_init(ks[4], (lstmOutputSize, actionDim), 0.01),
        actor_b=jnp.zeros((1, actionDim), jnp.float32),
        actor_logstd=jnp.zeros((1, actionDim), jnp.float32),
        critic_w=lin_init(ks[5], (lstmOutputSize, 1), 1.0),
        critic_b=jnp.zeros((1, 1), jnp.float32),
    )


def pack_params(params):
    """One-time (outside the hot path) repack of torch-layout weights into kernel layout."""
    # encoder map-weight permutation: wem[s*64 + c, :] = enc_w[c*4 + s, :]
    # (folds the torch NCHW Flatten of the (B,64,2,2) CNN output into the weight)
    perm = (np.arange(cnnChannels)[None, :] * SPATIAL2
            + np.arange(SPATIAL2)[:, None]).reshape(-1)
    wem = params['enc_w'][jnp.asarray(perm), :]                               # (256, 256)
    wee = jnp.pad(params['enc_w'][cnnOutputSize:, :],
                  ((0, EXTRA_PAD - extraFeatSize), (0, 0)))                   # (128, 256)
    encw = jnp.concatenate([wem, wee], axis=0).astype(jnp.bfloat16)           # (384, 256)

    hw = jnp.zeros((lstmOutputSize, HEAD_PAD), jnp.float32)
    hw = hw.at[:, :actionDim].set(params['actor_w'])
    hw = hw.at[:, actionDim:actionDim + 1].set(params['critic_w'])
    hb = jnp.zeros((1, HEAD_PAD), jnp.float32)
    hb = hb.at[:, :actionDim].set(params['actor_b'])
    hb = hb.at[:, actionDim:actionDim + 1].set(params['critic_b'])

    # TODO(synk): keep weights bf16 (not fp8) -- v7x MXU fp8 is not a drop-in for f32 weights.
    return dict(
        w1=jnp.pad(params['conv1_w'],
                   ((0, CONV1_K_PAD - CONV1_K), (0, 0))).astype(jnp.bfloat16),   # (256, 64)
        b1=params['conv1_b'],                                                    # (1, 64) f32
        w2=jnp.pad(params['conv2_w'],
                   ((0, CONV2_K_PAD - CONV2_K), (0, 0))).astype(jnp.bfloat16),   # (640, 64)
        b2=params['conv2_b'],                                                    # (1, 64) f32
        encw=encw,                                                               # (384, 256) bf16
        encb=params['enc_b'],                                                    # (1, 256) f32
        hw=hw.astype(jnp.bfloat16),                                              # (256, 128) bf16
        hb=hb,                                                                   # (1, 128) f32
        actor_logstd=params['actor_logstd'],
        weapon_emb=params['weapon_emb'],
    )


# ---------------- plain-JAX mirror of the torch forward (test-only reference) ----------------
def _reference_forward(params, obs_u8, noise):
    B = obs_u8.shape[0]

    def bf16rt(x):   # mirror the kernel's bf16 operand rounding (f32 accumulation everywhere)
        return x.astype(jnp.bfloat16).astype(jnp.float32)

    mp = unpack_map(obs_u8, B)
    wall = jax.nn.one_hot(mp[:, 0].astype(jnp.int32), wallTypes + 1, dtype=jnp.float32)
    floating = mp[:, 1].astype(jnp.float32)[..., None]
    pickup = mp[:, 2].astype(jnp.float32)[..., None]
    drone = jax.nn.one_hot(mp[:, 3].astype(jnp.int32), numDrones, dtype=jnp.float32)
    x = jnp.concatenate([wall, floating, pickup, drone], axis=-1)          # (B,16,16,9)

    def im2col(xx, k, stride):
        Bz, H, W, _ = xx.shape
        oh = (H - k) // stride + 1
        ow = (W - k) // stride + 1
        cols = []
        for i in range(oh):
            for j in range(ow):
                cols.append(xx[:, i * stride:i * stride + k,
                               j * stride:j * stride + k, :].reshape(Bz, -1))
        return jnp.stack(cols, axis=1)

    y1 = jnp.maximum(im2col(x, 5, 3) @ bf16rt(params['conv1_w']) + params['conv1_b'], 0.0)
    y1 = bf16rt(y1).reshape(B, conv1Out, conv1Out, cnnChannels)
    y2 = jnp.maximum(im2col(y1, 3, 1) @ bf16rt(params['conv2_w']) + params['conv2_b'], 0.0)
    y2 = bf16rt(y2).reshape(B, conv2Out, conv2Out, cnnChannels)
    map_flat = jnp.transpose(y2, (0, 3, 1, 2)).reshape(B, -1)              # NCHW Flatten

    mh_idx = (obs_u8[:, nearWallTypesObsOffset:projectileTypesObsOffset].astype(jnp.int32)
              + jnp.asarray(discreteOffsets)[None, :])
    multihot = jnp.zeros((B, discreteMultihotDim), jnp.float32).at[
        jnp.arange(B)[:, None], mh_idx].set(1.0)
    w_idx = obs_u8[:, projectileTypesObsOffset:discreteObsSize].astype(jnp.int32)
    wemb = params['weapon_emb'][w_idx].reshape(B, -1)
    cbytes = obs_u8[:, continuousObsOffset:].reshape(B, continuousObsSize, 4)
    cont = lax.bitcast_convert_type(cbytes, jnp.float32)
    extras = bf16rt(jnp.concatenate([multihot, wemb, cont], axis=-1))
    feat = jnp.concatenate([map_flat, extras], axis=-1)

    h = jnp.maximum(feat @ bf16rt(params['enc_w']) + params['enc_b'], 0.0)
    h_bf = bf16rt(h)
    mean = h_bf @ bf16rt(params['actor_w']) + params['actor_b'] + noise
    std = jnp.broadcast_to(jnp.exp(params['actor_logstd']), mean.shape)
    value = h_bf @ bf16rt(params['critic_w']) + params['critic_b']
    return (mean, std), value


if __name__ == "__main__":
    B = 2
    key = jax.random.PRNGKey(0)
    (kp_key, k_wall, k_float, k_pick, k_drone,
     k_mh, k_wt, k_cont, k_noise) = jax.random.split(key, 9)

    params = init_params(kp_key)
    kparams = pack_params(params)                # one-time weight repack (outside the hot path)

    # packed map bytes: bits [6:5]=wall type, [4]=floating wall, [3]=pickup, [2:0]=drone index
    wall = jax.random.randint(k_wall, (B, mapObsSize), 0, wallTypes)
    floating = jax.random.randint(k_float, (B, mapObsSize), 0, 2)
    pickup = jax.random.randint(k_pick, (B, mapObsSize), 0, 2)
    drone = jax.random.randint(k_drone, (B, mapObsSize), 0, numDrones)
    map_bytes = ((wall << 5) | (floating << 4) | (pickup << 3) | drone).astype(jnp.uint8)

    mh = jax.random.randint(k_mh, (B, numMultihotObs), 0, numDrones + 1).astype(jnp.uint8)
    wt = jax.random.randint(k_wt, (B, numWeaponTypeObs), 0, weaponTypes).astype(jnp.uint8)

    cont = jax.random.uniform(k_cont, (B, continuousObsSize), jnp.float32, -1.0, 1.0)
    cont_bytes = jnp.asarray(np.asarray(cont).view(np.uint8))          # (B, 124) little-endian

    obs = jnp.concatenate([map_bytes, mh, wt, cont_bytes], axis=1).astype(jnp.uint8)
    assert obs.shape == (B, obsSize)

    # TODO(synk): torch's uniform_(-0.25, 0.25) RNG stream can't be bit-matched; same distribution via jax.random.
    noise = jax.random.uniform(k_noise, (B, actionDim), jnp.float32, -0.25, 0.25)

    fwd = jax.jit(policy_forward)
    (mean, std), value = fwd(kparams, obs, noise)
    jax.block_until_ready((mean, std, value))

    assert mean.shape == (B, actionDim)
    assert std.shape == (B, actionDim)
    assert value.shape == (B, 1)

    # correctness: fused Pallas path vs. a plain-JAX mirror of the torch forward
    with jax.default_matmul_precision("float32"):
        (mean_ref, std_ref), value_ref = jax.jit(_reference_forward)(params, obs, noise)
    np.testing.assert_allclose(np.asarray(mean), np.asarray(mean_ref), rtol=2e-2, atol=2e-2)
    np.testing.assert_allclose(np.asarray(std), np.asarray(std_ref), rtol=1e-5, atol=1e-5)
    np.testing.assert_allclose(np.asarray(value), np.asarray(value_ref), rtol=2e-2, atol=2e-2)

    print("KERNEL_OK")
</pallas_src>

<mosaic_0001>
module attributes {stable_mosaic.version = 11 : i64} {
  func.func @_policy_fused_kernel(%arg0: i32, %arg1: memref<1x256x256xbf16, #tpu.memory_space<vmem>>, %arg2: memref<256x64xbf16, #tpu.memory_space<vmem>>, %arg3: memref<1x64xf32, #tpu.memory_space<vmem>>, %arg4: memref<640x64xbf16, #tpu.memory_space<vmem>>, %arg5: memref<1x64xf32, #tpu.memory_space<vmem>>, %arg6: memref<16x128xbf16, #tpu.memory_space<vmem>>, %arg7: memref<384x256xbf16, #tpu.memory_space<vmem>>, %arg8: memref<1x256xf32, #tpu.memory_space<vmem>>, %arg9: memref<256x128xbf16, #tpu.memory_space<vmem>>, %arg10: memref<1x128xf32, #tpu.memory_space<vmem>>, %arg11: memref<16x128xf32, #tpu.memory_space<vmem>>) attributes {dimension_semantics = [#tpu.dimension_semantics<parallel>], iteration_bounds = array<i64: 1>, scalar_prefetch = 0 : i64, scratch_operands = 0 : i64, tpu.core_type = #tpu.core_type<tc>, window_params = [{transform_indices = @transform_0, window_bounds = array<i64: 1, 256, 256>}, {pipeline_mode = #tpu.pipeline_mode<synchronous>, transform_indices = @transform_1, window_bounds = array<i64: 256, 64>}, {pipeline_mode = #tpu.pipeline_mode<synchronous>, transform_indices = @transform_2, window_bounds = array<i64: 1, 64>}, {pipeline_mode = #tpu.pipeline_mode<synchronous>, transform_indices = @transform_3, window_bounds = array<i64: 640, 64>}, {pipeline_mode = #tpu.pipeline_mode<synchronous>, transform_indices = @transform_4, window_bounds = array<i64: 1, 64>}, {transform_indices = @transform_5, window_bounds = array<i64: 16, 128>}, {pipeline_mode = #tpu.pipeline_mode<synchronous>, transform_indices = @transform_6, window_bounds = array<i64: 384, 256>}, {pipeline_mode = #tpu.pipeline_mode<synchronous>, transform_indices = @transform_7, window_bounds = array<i64: 1, 256>}, {pipeline_mode = #tpu.pipeline_mode<synchronous>, transform_indices = @transform_8, window_bounds = array<i64: 256, 128>}, {pipeline_mode = #tpu.pipeline_mode<synchronous>, transform_indices = @transform_9, window_bounds = array<i64: 1, 128>}, {transform_indices = @transform_10, window_bounds = array<i64: 16, 128>}]} {
    %c0 = arith.constant 0 : index
    %c0_0 = arith.constant 0 : index
    %c0_1 = arith.constant 0 : index
    %0 = vector.load %arg1[%c0, %c0_0, %c0_1] : memref<1x256x256xbf16, #tpu.memory_space<vmem>>, vector<1x256x256xbf16>
    %1 = vector.shape_cast %0 : vector<1x256x256xbf16> to vector<256x256xbf16>
    %c0_2 = arith.constant 0 : index
    %c0_3 = arith.constant 0 : index
    %2 = vector.load %arg2[%c0_2, %c0_3] : memref<256x64xbf16, #tpu.memory_space<vmem>>, vector<256x64xbf16>
    %cst = arith.constant dense<0.000000e+00> : vector<256x64xf32>
    %3 = tpu.matmul %1, %2, %cst {dimension_numbers = #tpu.dot_dimension_numbers<[1], [0], [0], [1], [0, 0, 1, 1], [], []>} : vector<256x256xbf16>, vector<256x64xbf16>, vector<256x64xf32> -> vector<256x64xf32>
    %c0_4 = arith.constant 0 : index
    %c0_5 = arith.constant 0 : index
    %4 = vector.load %arg3[%c0_4, %c0_5] : memref<1x64xf32, #tpu.memory_space<vmem>>, vector<1x64xf32>
    %5 = vector.broadcast %4 : vector<1x64xf32> to vector<256x64xf32>
    %6 = arith.addf %3, %5 : vector<256x64xf32>
    %cst_6 = arith.constant 0.000000e+00 : f32
    %7 = vector.broadcast %cst_6 : f32 to vector<256x64xf32>
    %8 = arith.maximumf %6, %7 : vector<256x64xf32>
    %9 = arith.truncf %8 : vector<256x64xf32> to vector<256x64xbf16>
    %10 = vector.extract_strided_slice %9 {offsets = [0, 0], sizes = [32, 64], strides = [1, 1]} : vector<256x64xbf16> to vector<32x64xbf16>
    %11 = vector.extract_strided_slice %9 {offsets = [64, 0], sizes = [32, 64], strides = [1, 1]} : vector<256x64xbf16> to vector<32x64xbf16>
    %12 = tpu.concatenate %10, %11 in 0 : vector<32x64xbf16>, vector<32x64xbf16> -> vector<64x64xbf16>
    %13 = vector.extract_strided_slice %9 {offsets = [16, 0], sizes = [32, 64], strides = [1, 1]} : vector<256x64xbf16> to vector<32x64xbf16>
    %14 = vector.extract_strided_slice %9 {offsets = [80, 0], sizes = [32, 64], strides = [1, 1]} : vector<256x64xbf16> to vector<32x64xbf16>
    %15 = tpu.concatenate %13, %14 in 0 : vector<32x64xbf16>, vector<32x64xbf16> -> vector<64x64xbf16>
    %16 = vector.extract_strided_slice %9 {offsets = [32, 0], sizes = [32, 64], strides = [1, 1]} : vector<256x64xbf16> to vector<32x64xbf16>
    %17 = vector.extract_strided_slice %9 {offsets = [96, 0], sizes = [32, 64], strides = [1, 1]} : vector<256x64xbf16> to vector<32x64xbf16>
    %18 = tpu.concatenate %16, %17 in 0 : vector<32x64xbf16>, vector<32x64xbf16> -> vector<64x64xbf16>
    %19 = vector.extract_strided_slice %9 {offsets = [64, 0], sizes = [32, 64], strides = [1, 1]} : vector<256x64xbf16> to vector<32x64xbf16>
    %20 = vector.extract_strided_slice %9 {offsets = [128, 0], sizes = [32, 64], strides = [1, 1]} : vector<256x64xbf16> to vector<32x64xbf16>
    %21 = tpu.concatenate %19, %20 in 0 : vector<32x64xbf16>, vector<32x64xbf16> -> vector<64x64xbf16>
    %22 = vector.extract_strided_slice %9 {offsets = [80, 0], sizes = [32, 64], strides = [1, 1]} : vector<256x64xbf16> to vector<32x64xbf16>
    %23 = vector.extract_strided_slice %9 {offsets = [144, 0], sizes = [32, 64], strides = [1, 1]} : vector<256x64xbf16> to vector<32x64xbf16>
    %24 = tpu.concatenate %22, %23 in 0 : vector<32x64xbf16>, vector<32x64xbf16> -> vector<64x64xbf16>
    %25 = vector.extract_strided_slice %9 {offsets = [96, 0], sizes = [32, 64], strides = [1, 1]} : vector<256x64xbf16> to vector<32x64xbf16>
    %26 = vector.extract_strided_slice %9 {offsets = [160, 0], sizes = [32, 64], strides = [1, 1]} : vector<256x64xbf16> to vector<32x64xbf16>
    %27 = tpu.concatenate %25, %26 in 0 : vector<32x64xbf16>, vector<32x64xbf16> -> vector<64x64xbf16>
    %28 = vector.extract_strided_slice %9 {offsets = [128, 0], sizes = [32, 64], strides = [1, 1]} : vector<256x64xbf16> to vector<32x64xbf16>
    %29 = vector.extract_strided_slice %9 {offsets = [192, 0], sizes = [32, 64], strides = [1, 1]} : vector<256x64xbf16> to vector<32x64xbf16>
    %30 = tpu.concatenate %28, %29 in 0 : vector<32x64xbf16>, vector<32x64xbf16> -> vector<64x64xbf16>
    %31 = vector.extract_strided_slice %9 {offsets = [144, 0], sizes = [32, 64], strides = [1, 1]} : vector<256x64xbf16> to vector<32x64xbf16>
    %32 = vector.extract_strided_slice %9 {offsets = [208, 0], sizes = [32, 64], strides = [1, 1]} : vector<256x64xbf16> to vector<32x64xbf16>
    %33 = tpu.concatenate %31, %32 in 0 : vector<32x64xbf16>, vector<32x64xbf16> -> vector<64x64xbf16>
    %34 = vector.extract_strided_slice %9 {offsets = [160, 0], sizes = [32, 64], strides = [1, 1]} : vector<256x64xbf16> to vector<32x64xbf16>
    %35 = vector.extract_strided_slice %9 {offsets = [224, 0], sizes = [32, 64], strides = [1, 1]} : vector<256x64xbf16> to vector<32x64xbf16>
    %36 = tpu.concatenate %34, %35 in 0 : vector<32x64xbf16>, vector<32x64xbf16> -> vector<64x64xbf16>
    %cst_7 = arith.constant 0.000000e+00 : bf16
    %37 = vector.broadcast %cst_7 : bf16 to vector<64x64xbf16>
    %38 = tpu.concatenate %12, %15, %18, %21, %24, %27, %30, %33, %36, %37 in 1 : vector<64x64xbf16>, vector<64x64xbf16>, vector<64x64xbf16>, vector<64x64xbf16>, vector<64x64xbf16>, vector<64x64xbf16>, vector<64x64xbf16>, vector<64x64xbf16>, vector<64x64xbf16>, vector<64x64xbf16> -> vector<64x640xbf16>
    %c0_8 = arith.constant 0 : index
    %c0_9 = arith.constant 0 : index
    %39 = vector.load %arg4[%c0_8, %c0_9] : memref<640x64xbf16, #tpu.memory_space<vmem>>, vector<640x64xbf16>
    %cst_10 = arith.constant dense<0.000000e+00> : vector<64x64xf32>
    %40 = tpu.matmul %38, %39, %cst_10 {dimension_numbers = #tpu.dot_dimension_numbers<[1], [0], [0], [1], [0, 0, 1, 1], [], []>} : vector<64x640xbf16>, vector<640x64xbf16>, vector<64x64xf32> -> vector<64x64xf32>
    %c0_11 = arith.constant 0 : index
    %c0_12 = arith.constant 0 : index
    %41 = vector.load %arg5[%c0_11, %c0_12] : memref<1x64xf32, #tpu.memory_space<vmem>>, vector<1x64xf32>
    %42 = vector.broadcast %41 : vector<1x64xf32> to vector<64x64xf32>
    %43 = arith.addf %40, %42 : vector<64x64xf32>
    %cst_13 = arith.constant 0.000000e+00 : f32
    %44 = vector.broadcast %cst_13 : f32 to vector<64x64xf32>
    %45 = arith.maximumf %43, %44 : vector<64x64xf32>
    %46 = arith.truncf %45 : vector<64x64xf32> to vector<64x64xbf16>
    %47 = vector.extract_strided_slice %46 {offsets = [0, 0], sizes = [16, 64], strides = [1, 1]} : vector<64x64xbf16> to vector<16x64xbf16>
    %48 = vector.extract_strided_slice %46 {offsets = [16, 0], sizes = [16, 64], strides = [1, 1]} : vector<64x64xbf16> to vector<16x64xbf16>
    %49 = vector.extract_strided_slice %46 {offsets = [32, 0], sizes = [16, 64], strides = [1, 1]} : vector<64x64xbf16> to vector<16x64xbf16>
    %50 = vector.extract_strided_slice %46 {offsets = [48, 0], sizes = [16, 64], strides = [1, 1]} : vector<64x64xbf16> to vector<16x64xbf16>
    %51 = tpu.concatenate %47, %48, %49, %50 in 1 : vector<16x64xbf16>, vector<16x64xbf16>, vector<16x64xbf16>, vector<16x64xbf16> -> vector<16x256xbf16>
    %c0_14 = arith.constant 0 : index
    %c0_15 = arith.constant 0 : index
    %52 = vector.load %arg6[%c0_14, %c0_15] : memref<16x128xbf16, #tpu.memory_space<vmem>>, vector<16x128xbf16>
    %53 = tpu.concatenate %51, %52 in 1 : vector<16x256xbf16>, vector<16x128xbf16> -> vector<16x384xbf16>
    %c0_16 = arith.constant 0 : index
    %c0_17 = arith.constant 0 : index
    %54 = vector.load %arg7[%c0_16, %c0_17] : memref<384x256xbf16, #tpu.memory_space<vmem>>, vector<384x256xbf16>
    %cst_18 = arith.constant dense<0.000000e+00> : vector<16x256xf32>
    %55 = tpu.matmul %53, %54, %cst_18 {dimension_numbers = #tpu.dot_dimension_numbers<[1], [0], [0], [1], [0, 0, 1, 1], [], []>} : vector<16x384xbf16>, vector<384x256xbf16>, vector<16x256xf32> -> vector<16x256xf32>
    %c0_19 = arith.constant 0 : index
    %c0_20 = arith.constant 0 : index
    %56 = vector.load %arg8[%c0_19, %c0_20] : memref<1x256xf32, #tpu.memory_space<vmem>>, vector<1x256xf32>
    %57 = vector.broadcast %56 : vector<1x256xf32> to vector<16x256xf32>
    %58 = arith.addf %55, %57 : vector<16x256xf32>
    %cst_21 = arith.constant 0.000000e+00 : f32
    %59 = vector.broadcast %cst_21 : f32 to vector<16x256xf32>
    %60 = arith.maximumf %58, %59 : vector<16x256xf32>
    %61 = arith.truncf %60 : vector<16x256xf32> to vector<16x256xbf16>
    %c0_22 = arith.constant 0 : index
    %c0_23 = arith.constant 0 : index
    %62 = vector.load %arg9[%c0_22, %c0_23] : memref<256x128xbf16, #tpu.memory_space<vmem>>, vector<256x128xbf16>
    %cst_24 = arith.constant dense<0.000000e+00> : vector<16x128xf32>
    %63 = tpu.matmul %61, %62, %cst_24 {dimension_numbers = #tpu.dot_dimension_numbers<[1], [0], [0], [1], [0, 0, 1, 1], [], []>} : vector<16x256xbf16>, vector<256x128xbf16>, vector<16x128xf32> -> vector<16x128xf32>
    %c0_25 = arith.constant 0 : index
    %c0_26 = arith.constant 0 : index
    %64 = vector.load %arg10[%c0_25, %c0_26] : memref<1x128xf32, #tpu.memory_space<vmem>>, vector<1x128xf32>
    %65 = vector.broadcast %64 : vector<1x128xf32> to vector<16x128xf32>
    %66 = arith.addf %63, %65 : vector<16x128xf32>
    %c0_27 = arith.constant 0 : index
    %c0_28 = arith.constant 0 : index
    %67 = vector.load %arg11[%c0_27, %c0_28] : memref<16x128xf32, #tpu.memory_space<vmem>>, vector<16x128xf32>
    tpu.vector_store %arg11[%c0_27, %c0_28], %66 {strides = array<i32>} : memref<16x128xf32, #tpu.memory_space<vmem>>, vector<16x128xf32>,
    return
  }
  func.func @transform_0(%arg0: i32) -> (i32, i32, i32) {
    %c0_i32 = arith.constant 0 : i32
    %c0_i32_0 = arith.constant 0 : i32
    %c0_i32_1 = arith.constant 0 : i32
    return %arg0, %c0_i32, %c0_i32_0 : i32, i32, i32
  }
  func.func @transform_1(%arg0: i32) -> (i32, i32) {
    %c0_i32 = arith.constant 0 : i32
    %c0_i32_0 = arith.constant 0 : i32
    %c0_i32_1 = arith.constant 0 : i32
    return %c0_i32, %c0_i32_0 : i32, i32
  }
  func.func @transform_2(%arg0: i32) -> (i32, i32) {
    %c0_i32 = arith.constant 0 : i32
    %c0_i32_0 = arith.constant 0 : i32
    %c0_i32_1 = arith.constant 0 : i32
    return %c0_i32, %c0_i32_0 : i32, i32
  }
  func.func @transform_3(%arg0: i32) -> (i32, i32) {
    %c0_i32 = arith.constant 0 : i32
    %c0_i32_0 = arith.constant 0 : i32
    %c0_i32_1 = arith.constant 0 : i32
    return %c0_i32, %c0_i32_0 : i32, i32
  }
  func.func @transform_4(%arg0: i32) -> (i32, i32) {
    %c0_i32 = arith.constant 0 : i32
    %c0_i32_0 = arith.constant 0 : i32
    %c0_i32_1 = arith.constant 0 : i32
    return %c0_i32, %c0_i32_0 : i32, i32
  }
  func.func @transform_5(%arg0: i32) -> (i32, i32) {
    %c0_i32 = arith.constant 0 : i32
    %c0_i32_0 = arith.constant 0 : i32
    return %arg0, %c0_i32 : i32, i32
  }
  func.func @transform_6(%arg0: i32) -> (i32, i32) {
    %c0_i32 = arith.constant 0 : i32
    %c0_i32_0 = arith.constant 0 : i32
    %c0_i32_1 = arith.constant 0 : i32
    return %c0_i32, %c0_i32_0 : i32, i32
  }
  func.func @transform_7(%arg0: i32) -> (i32, i32) {
    %c0_i32 = arith.constant 0 : i32
    %c0_i32_0 = arith.constant 0 : i32
    %c0_i32_1 = arith.constant 0 : i32
    return %c0_i32, %c0_i32_0 : i32, i32
  }
  func.func @transform_8(%arg0: i32) -> (i32, i32) {
    %c0_i32 = arith.constant 0 : i32
    %c0_i32_0 = arith.constant 0 : i32
    %c0_i32_1 = arith.constant 0 : i32
    return %c0_i32, %c0_i32_0 : i32, i32
  }
  func.func @transform_9(%arg0: i32) -> (i32, i32) {
    %c0_i32 = arith.constant 0 : i32
    %c0_i32_0 = arith.constant 0 : i32
    %c0_i32_1 = arith.constant 0 : i32
    return %c0_i32, %c0_i32_0 : i32, i32
  }
  func.func @transform_10(%arg0: i32) -> (i32, i32) {
    %c0_i32 = arith.constant 0 : i32
    %c0_i32_0 = arith.constant 0 : i32
    return %arg0, %c0_i32 : i32, i32
  }
}

</mosaic_0001>

<llo_original>
// kernel: policy_forward.1
$region0: #{policy_forward.1}
  #allocation0 [shape = 'u32[]', space=smem, size = 0x4, offset = 0x4, fixed_abs, tag = 'smem constant byte address 0x4 - core index']
  #allocation1 [shape = 'u32[144,128]{1,0:T(1,128)}', space=vmem, size = 0x12000, scoped, tag = 'internal scratch']
  %s0 = inlined_call_operand.vmem [shape: bf16[1,256,256], index: 0, kind: input, shape index: {}]
  %s1 = inlined_call_operand.vmem [shape: bf16[256,64], index: 1, kind: input, shape index: {}]
  %s2 = inlined_call_operand.vmem [shape: f32[1,64], index: 2, kind: input, shape index: {}]
  %s3 = inlined_call_operand.vmem [shape: bf16[640,64], index: 3, kind: input, shape index: {}]
  %s4 = inlined_call_operand.vmem [shape: f32[1,64], index: 4, kind: input, shape index: {}]
  %s5 = inlined_call_operand.vmem [shape: bf16[16,128], index: 5, kind: input, shape index: {}]
  %s6 = inlined_call_operand.vmem [shape: bf16[384,256], index: 6, kind: input, shape index: {}]
  %s7 = inlined_call_operand.vmem [shape: f32[1,256], index: 7, kind: input, shape index: {}]
  %s8 = inlined_call_operand.vmem [shape: bf16[256,128], index: 8, kind: input, shape index: {}]
  %s9 = inlined_call_operand.vmem [shape: f32[1,128], index: 9, kind: input, shape index: {}]
  %s10 = inlined_call_operand.vmem [shape: f32[16,128], index: 10, kind: output, shape index: {}]
  %s11 = sld [smem:[#allocation0]]
  $region50: #{policy_forward.1} parent=0
    _
  %s13 = ssub.s32 1, %s11
  %s14 = scalar_select 0, %s13, %s11
  // Predicated region
  $region2: #{policy_forward.1} parent=0 // pred_check
    _
  $region3: #{policy_forward.1} parent=0 // pred_check_branch
    %16 = sbr.rel (0) target = $region5
  $region4: #{policy_forward.1} parent=0 // pred_region
    _
  $region5: #{policy_forward.1} parent=0 // pred_fallthru
    _
  // Predicated region
  $region6: #{policy_forward.1} parent=0 // pred_check
    _
  $region7: #{policy_forward.1} parent=0 // pred_check_branch
    %18 = sbr.rel (0) target = $region9
  $region8: #{policy_forward.1} parent=0 // pred_region
    _
  $region9: #{policy_forward.1} parent=0 // pred_fallthru
    _
  // Predicated region
  $region10: #{policy_forward.1} parent=0 // pred_check
    _
  $region11: #{policy_forward.1} parent=0 // pred_check_branch
    %20 = sbr.rel (0) target = $region13
  $region12: #{policy_forward.1} parent=0 // pred_region
    _
  $region13: #{policy_forward.1} parent=0 // pred_fallthru
    _
  // Predicated region
  $region14: #{policy_forward.1} parent=0 // pred_check
    _
  $region15: #{policy_forward.1} parent=0 // pred_check_branch
    %22 = sbr.rel (0) target = $region17
  $region16: #{policy_forward.1} parent=0 // pred_region
    _
  $region17: #{policy_forward.1} parent=0 // pred_fallthru
    _
  // Predicated region
  $region18: #{policy_forward.1} parent=0 // pred_check
    _
  $region19: #{policy_forward.1} parent=0 // pred_check_branch
    %24 = sbr.rel (0) target = $region21
  $region20: #{policy_forward.1} parent=0 // pred_region
    _
  $region21: #{policy_forward.1} parent=0 // pred_fallthru
    _
  // Predicated region
  $region22: #{policy_forward.1} parent=0 // pred_check
    _
  $region23: #{policy_forward.1} parent=0 // pred_check_branch
    %26 = sbr.rel (0) target = $region25
  $region24: #{policy_forward.1} parent=0 // pred_region
    _
  $region25: #{policy_forward.1} parent=0 // pred_fallthru
    _
  // Predicated region
  $region26: #{policy_forward.1} parent=0 // pred_check
    _
  $region27: #{policy_forward.1} parent=0 // pred_check_branch
    %28 = sbr.rel (0) target = $region29
  $region28: #{policy_forward.1} parent=0 // pred_region
    _
  $region29: #{policy_forward.1} parent=0 // pred_fallthru
    _
  // Predicated region
  $region30: #{policy_forward.1} parent=0 // pred_check
    _
  $region31: #{policy_forward.1} parent=0 // pred_check_branch
    %30 = sbr.rel (0) target = $region33
  $region32: #{policy_forward.1} parent=0 // pred_region
    _
  $region33: #{policy_forward.1} parent=0 // pred_fallthru
    _
  // Predicated region
  $region34: #{policy_forward.1} parent=0 // pred_check
    _
  $region35: #{policy_forward.1} parent=0 // pred_check_branch
    %32 = sbr.rel (0) target = $region37
  $region36: #{policy_forward.1} parent=0 // pred_region
    _
  $region37: #{policy_forward.1} parent=0 // pred_fallthru
    _
  // Predicated region
  $region38: #{policy_forward.1} parent=0 // pred_check
    _
  $region39: #{policy_forward.1} parent=0 // pred_check_branch
    %34 = sbr.rel (0) target = $region41
  $region40: #{policy_forward.1} parent=0 // pred_region
    _
  $region41: #{policy_forward.1} parent=0 // pred_fallthru
    _
  %v36 = vld [vmem:[%s0] sm:$0xff]
  %v37 = vld [vmem:[%s0 + $0x8] sm:$0xff]
  %v38 = vld [vmem:[%s0 + $0x10] sm:$0xff]
  %v39 = vld [vmem:[%s0 + $0x18] sm:$0xff]
  %v40 = vld [vmem:[%s0 + $0x20] sm:$0xff]
  %v41 = vld [vmem:[%s0 + $0x28] sm:$0xff]
  %v42 = vld [vmem:[%s0 + $0x30] sm:$0xff]
  %v43 = vld [vmem:[%s0 + $0x38] sm:$0xff]
  %v44 = vld [vmem:[%s0 + $0x40] sm:$0xff]
  %v45 = vld [vmem:[%s0 + $0x48] sm:$0xff]
  %v46 = vld [vmem:[%s0 + $0x50] sm:$0xff]
  %v47 = vld [vmem:[%s0 + $0x58] sm:$0xff]
  %v48 = vld [vmem:[%s0 + $0x60] sm:$0xff]
  %v49 = vld [vmem:[%s0 + $0x68] sm:$0xff]
  %v50 = vld [vmem:[%s0 + $0x70] sm:$0xff]
  %v51 = vld [vmem:[%s0 + $0x78] sm:$0xff]
  %v52 = vld [vmem:[%s0 + $0x80] sm:$0xff]
  %v53 = vld [vmem:[%s0 + $0x88] sm:$0xff]
  %v54 = vld [vmem:[%s0 + $0x90] sm:$0xff]
  %v55 = vld [vmem:[%s0 + $0x98] sm:$0xff]
  %v56 = vld [vmem:[%s0 + $0xa0] sm:$0xff]
  %v57 = vld [vmem:[%s0 + $0xa8] sm:$0xff]
  %v58 = vld [vmem:[%s0 + $0xb0] sm:$0xff]
  %v59 = vld [vmem:[%s0 + $0xb8] sm:$0xff]
  %v60 = vld [vmem:[%s0 + $0xc0] sm:$0xff]
  %v61 = vld [vmem:[%s0 + $0xc8] sm:$0xff]
  %v62 = vld [vmem:[%s0 + $0xd0] sm:$0xff]
  %v63 = vld [vmem:[%s0 + $0xd8] sm:$0xff]
  %v64 = vld [vmem:[%s0 + $0xe0] sm:$0xff]
  %v65 = vld [vmem:[%s0 + $0xe8] sm:$0xff]
  %v66 = vld [vmem:[%s0 + $0xf0] sm:$0xff]
  %v67 = vld [vmem:[%s0 + $0xf8] sm:$0xff]
  %v68 = vld [vmem:[%s1] sm:$0xf]
  %v69 = vld [vmem:[%s1 + $0x4] sm:$0xf]
  %v70 = vld [vmem:[%s1 + $0x8] sm:$0xf]
  %v71 = vld [vmem:[%s1 + $0xc] sm:$0xf]
  %v72 = vld [vmem:[%s1 + $0x10] sm:$0xf]
  %v73 = vld [vmem:[%s1 + $0x14] sm:$0xf]
  %v74 = vld [vmem:[%s1 + $0x18] sm:$0xf]
  %v75 = vld [vmem:[%s1 + $0x1c] sm:$0xf]
  %v76 = vld [vmem:[%s1 + $0x20] sm:$0xf]
  %v77 = vld [vmem:[%s1 + $0x24] sm:$0xf]
  %v78 = vld [vmem:[%s1 + $0x28] sm:$0xf]
  %v79 = vld [vmem:[%s1 + $0x2c] sm:$0xf]
  %v80 = vld [vmem:[%s1 + $0x30] sm:$0xf]
  %v81 = vld [vmem:[%s1 + $0x34] sm:$0xf]
  %v82 = vld [vmem:[%s1 + $0x38] sm:$0xf]
  %v83 = vld [vmem:[%s1 + $0x3c] sm:$0xf]
  %v84 = vld [vmem:[%s1 + $0x40] sm:$0xf]
  %v85 = vld [vmem:[%s1 + $0x44] sm:$0xf]
  %v86 = vld [vmem:[%s1 + $0x48] sm:$0xf]
  %v87 = vld [vmem:[%s1 + $0x4c] sm:$0xf]
  %v88 = vld [vmem:[%s1 + $0x50] sm:$0xf]
  %v89 = vld [vmem:[%s1 + $0x54] sm:$0xf]
  %v90 = vld [vmem:[%s1 + $0x58] sm:$0xf]
  %v91 = vld [vmem:[%s1 + $0x5c] sm:$0xf]
  %v92 = vld [vmem:[%s1 + $0x60] sm:$0xf]
  %v93 = vld [vmem:[%s1 + $0x64] sm:$0xf]
  %v94 = vld [vmem:[%s1 + $0x68] sm:$0xf]
  %v95 = vld [vmem:[%s1 + $0x6c] sm:$0xf]
  %v96 = vld [vmem:[%s1 + $0x70] sm:$0xf]
  %v97 = vld [vmem:[%s1 + $0x74] sm:$0xf]
  %v98 = vld [vmem:[%s1 + $0x78] sm:$0xf]
  %v99 = vld [vmem:[%s1 + $0x7c] sm:$0xf]
  %v100 = vld [vmem:[%s2] sm:$0x1]
  %v102 = vlaneseq
  %v103 = vshrl.u32 %v102, 7
  %v104 = vsub.s32 0, %v103
  %v105 = vrot.slane %v100, %v104
  %v139 = vunpack.c.l.b16 %v36
  %v140 = vunpack.c.h.b16 %v36
  %v141 = vunpack.c.l.b16 %v37
  %v142 = vunpack.c.h.b16 %v37
  %v143 = vunpack.c.l.b16 %v38
  %v144 = vunpack.c.h.b16 %v38
  %v145 = vunpack.c.l.b16 %v39
  %v146 = vunpack.c.h.b16 %v39
  %v147 = vunpack.c.l.b16 %v40
  %v148 = vunpack.c.h.b16 %v40
  %v149 = vunpack.c.l.b16 %v41
  %v150 = vunpack.c.h.b16 %v41
  %v151 = vunpack.c.l.b16 %v42
  %v152 = vunpack.c.h.b16 %v42
  %v153 = vunpack.c.l.b16 %v43
  %v154 = vunpack.c.h.b16 %v43
  %v155 = vunpack.c.l.b16 %v44
  %v156 = vunpack.c.h.b16 %v44
  %v157 = vunpack.c.l.b16 %v45
  %v158 = vunpack.c.h.b16 %v45
  %v159 = vunpack.c.l.b16 %v46
  %v160 = vunpack.c.h.b16 %v46
  %v161 = vunpack.c.l.b16 %v47
  %v162 = vunpack.c.h.b16 %v47
  %v163 = vunpack.c.l.b16 %v48
  %v164 = vunpack.c.h.b16 %v48
  %v165 = vunpack.c.l.b16 %v49
  %v166 = vunpack.c.h.b16 %v49
  %v167 = vunpack.c.l.b16 %v50
  %v168 = vunpack.c.h.b16 %v50
  %v169 = vunpack.c.l.b16 %v51
  %v170 = vunpack.c.h.b16 %v51
  %v171 = vunpack.c.l.b16 %v52
  %v172 = vunpack.c.h.b16 %v52
  %v173 = vunpack.c.l.b16 %v53
  %v174 = vunpack.c.h.b16 %v53
  %v175 = vunpack.c.l.b16 %v54
  %v176 = vunpack.c.h.b16 %v54
  %v177 = vunpack.c.l.b16 %v55
  %v178 = vunpack.c.h.b16 %v55
  %v179 = vunpack.c.l.b16 %v56
  %v180 = vunpack.c.h.b16 %v56
  %v181 = vunpack.c.l.b16 %v57
  %v182 = vunpack.c.h.b16 %v57
  %v183 = vunpack.c.l.b16 %v58
  %v184 = vunpack.c.h.b16 %v58
  %v185 = vunpack.c.l.b16 %v59
  %v186 = vunpack.c.h.b16 %v59
  %v187 = vunpack.c.l.b16 %v60
  %v188 = vunpack.c.h.b16 %v60
  %v189 = vunpack.c.l.b16 %v61
  %v190 = vunpack.c.h.b16 %v61
  %v191 = vunpack.c.l.b16 %v62
  %v192 = vunpack.c.h.b16 %v62
  %v193 = vunpack.c.l.b16 %v63
  %v194 = vunpack.c.h.b16 %v63
  %v195 = vunpack.c.l.b16 %v64
  %v196 = vunpack.c.h.b16 %v64
  %v197 = vunpack.c.l.b16 %v65
  %v198 = vunpack.c.h.b16 %v65
  %v199 = vunpack.c.l.b16 %v66
  %v200 = vunpack.c.h.b16 %v66
  %v201 = vunpack.c.l.b16 %v67
  %v202 = vunpack.c.h.b16 %v67
  %v203 = vpack.c.b16 %v141, %v139
  %v204 = vpack.c.b16 %v142, %v140
  %v205 = vpack.c.b16 %v145, %v143
  %v206 = vpack.c.b16 %v146, %v144
  %v207 = vpack.c.b16 %v149, %v147
  %v208 = vpack.c.b16 %v150, %v148
  %v209 = vpack.c.b16 %v153, %v151
  %v210 = vpack.c.b16 %v154, %v152
  %v211 = vpack.c.b16 %v157, %v155
  %v212 = vpack.c.b16 %v158, %v156
  %v213 = vpack.c.b16 %v161, %v159
  %v214 = vpack.c.b16 %v162, %v160
  %v215 = vpack.c.b16 %v165, %v163
  %v216 = vpack.c.b16 %v166, %v164
  %v217 = vpack.c.b16 %v169, %v167
  %v218 = vpack.c.b16 %v170, %v168
  %v219 = vpack.c.b16 %v173, %v171
  %v220 = vpack.c.b16 %v174, %v172
  %v221 = vpack.c.b16 %v177, %v175
  %v222 = vpack.c.b16 %v178, %v176
  %v223 = vpack.c.b16 %v181, %v179
  %v224 = vpack.c.b16 %v182, %v180
  %v225 = vpack.c.b16 %v185, %v183
  %v226 = vpack.c.b16 %v186, %v184
  %v227 = vpack.c.b16 %v189, %v187
  %v228 = vpack.c.b16 %v190, %v188
  %v229 = vpack.c.b16 %v193, %v191
  %v230 = vpack.c.b16 %v194, %v192
  %v231 = vpack.c.b16 %v197, %v195
  %v232 = vpack.c.b16 %v198, %v196
  %v233 = vpack.c.b16 %v201, %v199
  %v234 = vpack.c.b16 %v202, %v200
  %v299 = vunpack.c.l.b16 %v68
  %v300 = vunpack.c.l.b16 %v69
  %v301 = vunpack.c.l.b16 %v70
  %v302 = vunpack.c.l.b16 %v71
  %v303 = vunpack.c.l.b16 %v72
  %v304 = vunpack.c.l.b16 %v73
  %v305 = vunpack.c.l.b16 %v74
  %v306 = vunpack.c.l.b16 %v75
  %v307 = vunpack.c.l.b16 %v76
  %v308 = vunpack.c.l.b16 %v77
  %v309 = vunpack.c.l.b16 %v78
  %v310 = vunpack.c.l.b16 %v79
  %v311 = vunpack.c.l.b16 %v80
  %v312 = vunpack.c.l.b16 %v81
  %v313 = vunpack.c.l.b16 %v82
  %v314 = vunpack.c.l.b16 %v83
  %v315 = vunpack.c.l.b16 %v84
  %v316 = vunpack.c.l.b16 %v85
  %v317 = vunpack.c.l.b16 %v86
  %v318 = vunpack.c.l.b16 %v87
  %v319 = vunpack.c.l.b16 %v88
  %v320 = vunpack.c.l.b16 %v89
  %v321 = vunpack.c.l.b16 %v90
  %v322 = vunpack.c.l.b16 %v91
  %v323 = vunpack.c.l.b16 %v92
  %v324 = vunpack.c.l.b16 %v93
  %v325 = vunpack.c.l.b16 %v94
  %v326 = vunpack.c.l.b16 %v95
  %v327 = vunpack.c.l.b16 %v96
  %v328 = vunpack.c.l.b16 %v97
  %v329 = vunpack.c.l.b16 %v98
  %v330 = vunpack.c.l.b16 %v99
  %v331 = vpack.c.b16 %v300, %v299
  %v332 = vpack.c.b16 %v302, %v301
  %v333 = vpack.c.b16 %v304, %v303
  %v334 = vpack.c.b16 %v306, %v305
  %v335 = vpack.c.b16 %v308, %v307
  %v336 = vpack.c.b16 %v310, %v309
  %v337 = vpack.c.b16 %v312, %v311
  %v338 = vpack.c.b16 %v314, %v313
  %v339 = vpack.c.b16 %v316, %v315
  %v340 = vpack.c.b16 %v318, %v317
  %v341 = vpack.c.b16 %v320, %v319
  %v342 = vpack.c.b16 %v322, %v321
  %v343 = vpack.c.b16 %v324, %v323
  %v344 = vpack.c.b16 %v326, %v325
  %v345 = vpack.c.b16 %v328, %v327
  %v346 = vpack.c.b16 %v330, %v329
  %363 = vmatprep.subr.bf16.mxu0 0
  %364 = vmatpush1.bf16.msra.mxu0 %v331
  %365 = vmatprep.subr.bf16.mxu0 0
  %366 = vmatpush1.bf16.msra.mxu0 %v332
  %367 = vmatprep.subr.bf16.mxu0 0
  %368 = vmatpush1.bf16.msra.mxu0 %v333
  %369 = vmatprep.subr.bf16.mxu0 0
  %370 = vmatpush1.bf16.msra.mxu0 %v334
  %371 = vmatprep.subr.bf16.mxu0 0
  %372 = vmatpush1.bf16.msra.mxu0 %v335
  %373 = vmatprep.subr.bf16.mxu0 0
  %374 = vmatpush1.bf16.msra.mxu0 %v336
  %375 = vmatprep.subr.bf16.mxu0 0
  %376 = vmatpush1.bf16.msra.mxu0 %v337
  %377 = vmatprep.subr.bf16.mxu0 0
  %378 = vmatpush1.bf16.msra.mxu0 %v338
  %379 = vmatprep.subr.bf16.mxu0 0
  %380 = vmatpush1.bf16.msra.mxu0 %v339
  %381 = vmatprep.subr.bf16.mxu0 0
  %382 = vmatpush1.bf16.msra.mxu0 %v340
  %383 = vmatprep.subr.bf16.mxu0 0
  %384 = vmatpush1.bf16.msra.mxu0 %v341
  %385 = vmatprep.subr.bf16.mxu0 0
  %386 = vmatpush1.bf16.msra.mxu0 %v342
  %387 = vmatprep.subr.bf16.mxu0 0
  %388 = vmatpush1.bf16.msra.mxu0 %v343
  %389 = vmatprep.subr.bf16.mxu0 0
  %390 = vmatpush1.bf16.msra.mxu0 %v344
  %391 = vmatprep.subr.bf16.mxu0 0
  %392 = vmatpush1.bf16.msra.mxu0 %v345
  %393 = vmatprep.subr.bf16.mxu0 0
  %394 = vmatpush1.bf16.msra.mxu0 %v346
  %395 = vmatprep.mubr.bf16.mxu0 %v204
  %396 = vmatmul.mubr.bf16.gmra.mrb[0].mxu0 %v203
  %v397 = vpop.f32.mrb[0].mxu0
  %v398 = vadd.f32 %v105, %v397
  %v399 = vpop.f32.mrb[0].mxu0
  %v400 = vpop.f32.mrb[0].mxu0
  %v401 = vadd.f32 %v105, %v400
  %v402 = vpop.f32.mrb[0].mxu0
  %403 = vmatprep.mubr.bf16.mxu0 %v206
  %404 = vmatmul.mubr.bf16.gmra.mrb[0].mxu0 %v205
  %v405 = vpop.f32.mrb[0].mxu0
  %v406 = vadd.f32 %v105, %v405
  %v407 = vpop.f32.mrb[0].mxu0
  %v408 = vpop.f32.mrb[0].mxu0
  %v409 = vadd.f32 %v105, %v408
  %v410 = vpop.f32.mrb[0].mxu0
  %411 = vmatprep.mubr.bf16.mxu0 %v208
  %412 = vmatmul.mubr.bf16.gmra.mrb[0].mxu0 %v207
  %v413 = vpop.f32.mrb[0].mxu0
  %v414 = vadd.f32 %v105, %v413
  %v415 = vpop.f32.mrb[0].mxu0
  %v416 = vpop.f32.mrb[0].mxu0
  %v417 = vadd.f32 %v105, %v416
  %v418 = vpop.f32.mrb[0].mxu0
  %419 = vmatprep.mubr.bf16.mxu0 %v210
  %420 = vmatmul.mubr.bf16.gmra.mrb[0].mxu0 %v209
  %v421 = vpop.f32.mrb[0].mxu0
  %v422 = vadd.f32 %v105, %v421
  %v423 = vpop.f32.mrb[0].mxu0
  %v424 = vpop.f32.mrb[0].mxu0
  %v425 = vadd.f32 %v105, %v424
  %v426 = vpop.f32.mrb[0].mxu0
  %427 = vmatprep.mubr.bf16.mxu0 %v212
  %428 = vmatmul.mubr.bf16.gmra.mrb[0].mxu0 %v211
  %v429 = vpop.f32.mrb[0].mxu0
  %v430 = vadd.f32 %v105, %v429
  %v431 = vpop.f32.mrb[0].mxu0
  %v432 = vpop.f32.mrb[0].mxu0
  %v433 = vadd.f32 %v105, %v432
  %v434 = vpop.f32.mrb[0].mxu0
  %435 = vmatprep.mubr.bf16.mxu0 %v214
  %436 = vmatmul.mubr.bf16.gmra.mrb[0].mxu0 %v213
  %v437 = vpop.f32.mrb[0].mxu0
  %v438 = vadd.f32 %v105, %v437
  %v439 = vpop.f32.mrb[0].mxu0
  %v440 = vpop.f32.mrb[0].mxu0
  %v441 = vadd.f32 %v105, %v440
  %v442 = vpop.f32.mrb[0].mxu0
  %443 = vmatprep.mubr.bf16.mxu0 %v216
  %444 = vmatmul.mubr.bf16.gmra.mrb[0].mxu0 %v215
  %v445 = vpop.f32.mrb[0].mxu0
  %v446 = vadd.f32 %v105, %v445
  %v447 = vpop.f32.mrb[0].mxu0
  %v448 = vpop.f32.mrb[0].mxu0
  %v449 = vadd.f32 %v105, %v448
  %v450 = vpop.f32.mrb[0].mxu0
  %451 = vmatprep.mubr.bf16.mxu0 %v218
  %452 = vmatmul.mubr.bf16.gmra.mrb[0].mxu0 %v217
  %v453 = vpop.f32.mrb[0].mxu0
  %v454 = vadd.f32 %v105, %v453
  %v455 = vpop.f32.mrb[0].mxu0
  %v456 = vpop.f32.mrb[0].mxu0
  %v457 = vadd.f32 %v105, %v456
  %v458 = vpop.f32.mrb[0].mxu0
  %459 = vmatprep.mubr.bf16.mxu0 %v220
  %460 = vmatmul.mubr.bf16.gmra.mrb[0].mxu0 %v219
  %v461 = vpop.f32.mrb[0].mxu0
  %v462 = vadd.f32 %v105, %v461
  %v463 = vpop.f32.mrb[0].mxu0
  %v464 = vpop.f32.mrb[0].mxu0
  %v465 = vadd.f32 %v105, %v464
  %v466 = vpop.f32.mrb[0].mxu0
  %467 = vmatprep.mubr.bf16.mxu0 %v222
  %468 = vmatmul.mubr.bf16.gmra.mrb[0].mxu0 %v221
  %v469 = vpop.f32.mrb[0].mxu0
  %v470 = vadd.f32 %v105, %v469
  %v471 = vpop.f32.mrb[0].mxu0
  %v472 = vpop.f32.mrb[0].mxu0
  %v473 = vadd.f32 %v105, %v472
  %v474 = vpop.f32.mrb[0].mxu0
  %475 = vmatprep.mubr.bf16.mxu0 %v224
  %476 = vmatmul.mubr.bf16.gmra.mrb[0].mxu0 %v223
  %v477 = vpop.f32.mrb[0].mxu0
  %v478 = vadd.f32 %v105, %v477
  %v479 = vpop.f32.mrb[0].mxu0
  %v480 = vpop.f32.mrb[0].mxu0
  %v481 = vadd.f32 %v105, %v480
  %v482 = vpop.f32.mrb[0].mxu0
  %483 = vmatprep.mubr.bf16.mxu0 %v226
  %484 = vmatmul.mubr.bf16.gmra.mrb[0].mxu0 %v225
  %v485 = vpop.f32.mrb[0].mxu0
  %v486 = vadd.f32 %v105, %v485
  %v487 = vpop.f32.mrb[0].mxu0
  %v488 = vpop.f32.mrb[0].mxu0
  %v489 = vadd.f32 %v105, %v488
  %v490 = vpop.f32.mrb[0].mxu0
  %491 = vmatprep.mubr.bf16.mxu0 %v228
  %492 = vmatmul.mubr.bf16.gmra.mrb[0].mxu0 %v227
  %v493 = vpop.f32.mrb[0].mxu0
  %v494 = vadd.f32 %v105, %v493
  %v495 = vpop.f32.mrb[0].mxu0
  %v496 = vpop.f32.mrb[0].mxu0
  %v497 = vadd.f32 %v105, %v496
  %v498 = vpop.f32.mrb[0].mxu0
  %499 = vmatprep.mubr.bf16.mxu0 %v230
  %500 = vmatmul.mubr.bf16.gmra.mrb[0].mxu0 %v229
  %v501 = vpop.f32.mrb[0].mxu0
  %v502 = vadd.f32 %v105, %v501
  %v503 = vpop.f32.mrb[0].mxu0
  %v504 = vpop.f32.mrb[0].mxu0
  %v505 = vadd.f32 %v105, %v504
  %v506 = vpop.f32.mrb[0].mxu0
  %507 = vmatprep.mubr.bf16.mxu0 %v232
  %508 = vmatmul.mubr.bf16.gmra.mrb[0].mxu0 %v231
  %v509 = vpop.f32.mrb[0].mxu0
  %v510 = vadd.f32 %v105, %v509
  %v511 = vpop.f32.mrb[0].mxu0
  %v512 = vpop.f32.mrb[0].mxu0
  %v513 = vadd.f32 %v105, %v512
  %v514 = vpop.f32.mrb[0].mxu0
  %515 = vmatprep.mubr.bf16.mxu0 %v234
  %516 = vmatmul.mubr.bf16.gmra.mrb[0].mxu0 %v233
  %v517 = vpop.f32.mrb[0].mxu0
  %v518 = vadd.f32 %v105, %v517
  %v519 = vpop.f32.mrb[0].mxu0
  %v520 = vpop.f32.mrb[0].mxu0
  %v521 = vadd.f32 %v105, %v520
  %v522 = vpop.f32.mrb[0].mxu0
  %523 = vdwg.mxu0
  %v524 = vmax.f32 %v398, 0.0
  %v525 = vmax.f32 %v401, 0.0
  %v526 = vmax.f32 %v406, 0.0
  %v527 = vmax.f32 %v409, 0.0
  %v528 = vmax.f32 %v414, 0.0
  %v529 = vmax.f32 %v417, 0.0
  %v530 = vmax.f32 %v422, 0.0
  %v531 = vmax.f32 %v425, 0.0
  %v532 = vmax.f32 %v430, 0.0
  %v533 = vmax.f32 %v433, 0.0
  %v534 = vmax.f32 %v438, 0.0
  %v535 = vmax.f32 %v441, 0.0
  %v536 = vmax.f32 %v446, 0.0
  %v537 = vmax.f32 %v449, 0.0
  %v538 = vmax.f32 %v454, 0.0
  %v539 = vmax.f32 %v457, 0.0
  %v540 = vmax.f32 %v462, 0.0
  %v541 = vmax.f32 %v465, 0.0
  %v542 = vmax.f32 %v470, 0.0
  %v543 = vmax.f32 %v473, 0.0
  %v544 = vmax.f32 %v478, 0.0
  %v545 = vmax.f32 %v481, 0.0
  %v546 = vmax.f32 %v486, 0.0
  %v547 = vmax.f32 %v489, 0.0
  %v548 = vmax.f32 %v494, 0.0
  %v549 = vmax.f32 %v497, 0.0
  %v550 = vmax.f32 %v502, 0.0
  %v551 = vmax.f32 %v505, 0.0
  %v552 = vmax.f32 %v510, 0.0
  %v553 = vmax.f32 %v513, 0.0
  %v554 = vmax.f32 %v518, 0.0
  %v555 = vmax.f32 %v521, 0.0
  %v556 = vpack.c.bf16 %v525, %v524
  %v557 = vpack.c.bf16 %v527, %v526
  %v558 = vpack.c.bf16 %v529, %v528
  %v559 = vpack.c.bf16 %v531, %v530
  %v560 = vpack.c.bf16 %v533, %v532
  %v561 = vpack.c.bf16 %v535, %v534
  %v562 = vpack.c.bf16 %v537, %v536
  %v563 = vpack.c.bf16 %v539, %v538
  %v564 = vpack.c.bf16 %v541, %v540
  %v565 = vpack.c.bf16 %v543, %v542
  %v566 = vpack.c.bf16 %v545, %v544
  %v567 = vpack.c.bf16 %v547, %v546
  %v568 = vpack.c.bf16 %v549, %v548
  %v569 = vpack.c.bf16 %v551, %v550
  %v570 = vpack.c.bf16 %v553, %v552
  %v571 = vpack.c.bf16 %v555, %v554
  %576 = vrot.lane.b32.xlu0 %v557, 64
  %v577 = vpop.permute.xlu0 %576
  %578 = vrot.lane.b32.xlu0 %v558, 64
  %v579 = vpop.permute.xlu0 %578
  %580 = vrot.lane.b32.xlu0 %v561, 64
  %v581 = vpop.permute.xlu0 %580
  %582 = vrot.lane.b32.xlu0 %v562, 64
  %v583 = vpop.permute.xlu0 %582
  %587 = vrot.lane.b32.xlu0 %v560, 64
  %v588 = vpop.permute.xlu0 %587
  %589 = vrot.lane.b32.xlu0 %v564, 64
  %v590 = vpop.permute.xlu0 %589
  %591 = vrot.lane.b32.xlu0 %v565, 64
  %v592 = vpop.permute.xlu0 %591
  %596 = vrot.lane.b32.xlu0 %v563, 64
  %v597 = vpop.permute.xlu0 %596
  %598 = vrot.lane.b32.xlu0 %v566, 64
  %v599 = vpop.permute.xlu0 %598
  %600 = vrot.lane.b32.xlu0 %v567, 64
  %v601 = vpop.permute.xlu0 %600
  %604 = vrot.lane.b32.xlu0 %v569, 64
  %v605 = vpop.permute.xlu0 %604
  %606 = vrot.lane.b32.xlu0 %v570, 64
  %v607 = vpop.permute.xlu0 %606
  %vm608 = vcmask 523264
  %v611 = vsel %vm608, %v556, %v577
  %v615 = vsel %vm608, %v557, %v579
  %v619 = vsel %vm608, %v560, %v581
  %v623 = vsel %vm608, %v561, %v583
  %v627 = vsel %vm608, %v558, %v588
  %v630 = vsel %vm608, %v559, %v581
  %v634 = vsel %vm608, %v562, %v590
  %v638 = vsel %vm608, %v563, %v592
  %v641 = vsel %vm608, %v562, %v597
  %v645 = vsel %vm608, %v565, %v599
  %v649 = vsel %vm608, %v566, %v601
  %v652 = vsel %vm608, %v564, %v592
  %v656 = vsel %vm608, %v568, %v605
  %v660 = vsel %vm608, %v569, %v607
  %v663 = vsel %vm608, %v566, 0
  %v666 = vsel %vm608, %v567, 0
  %v669 = vsel %vm608, %v570, 0
  %v672 = vsel %vm608, %v571, 0
  %v674 = vld [vmem:[%s3] sm:$0xf]
  %v675 = vld [vmem:[%s3 + $0x4] sm:$0xf]
  %v676 = vld [vmem:[%s3 + $0x8] sm:$0xf]
  %v677 = vld [vmem:[%s3 + $0xc] sm:$0xf]
  %v678 = vld [vmem:[%s3 + $0x10] sm:$0xf]
  %v679 = vld [vmem:[%s3 + $0x14] sm:$0xf]
  %v680 = vld [vmem:[%s3 + $0x18] sm:$0xf]
  %v681 = vld [vmem:[%s3 + $0x1c] sm:$0xf]
  %v682 = vld [vmem:[%s3 + $0x20] sm:$0xf]
  %v683 = vld [vmem:[%s3 + $0x24] sm:$0xf]
  %v684 = vld [vmem:[%s3 + $0x28] sm:$0xf]
  %v685 = vld [vmem:[%s3 + $0x2c] sm:$0xf]
  %v686 = vld [vmem:[%s3 + $0x30] sm:$0xf]
  %v687 = vld [vmem:[%s3 + $0x34] sm:$0xf]
  %v688 = vld [vmem:[%s3 + $0x38] sm:$0xf]
  %v689 = vld [vmem:[%s3 + $0x3c] sm:$0xf]
  %v690 = vld [vmem:[%s3 + $0x40] sm:$0xf]
  %v691 = vld [vmem:[%s3 + $0x44] sm:$0xf]
  %v692 = vld [vmem:[%s3 + $0x48] sm:$0xf]
  %v693 = vld [vmem:[%s3 + $0x4c] sm:$0xf]
  %v694 = vld [vmem:[%s3 + $0x50] sm:$0xf]
  %v695 = vld [vmem:[%s3 + $0x54] sm:$0xf]
  %v696 = vld [vmem:[%s3 + $0x58] sm:$0xf]
  %v697 = vld [vmem:[%s3 + $0x5c] sm:$0xf]
  %v698 = vld [vmem:[%s3 + $0x60] sm:$0xf]
  %v699 = vld [vmem:[%s3 + $0x64] sm:$0xf]
  %v700 = vld [vmem:[%s3 + $0x68] sm:$0xf]
  %v701 = vld [vmem:[%s3 + $0x6c] sm:$0xf]
  %v702 = vld [vmem:[%s3 + $0x70] sm:$0xf]
  %v703 = vld [vmem:[%s3 + $0x74] sm:$0xf]
  %v704 = vld [vmem:[%s3 + $0x78] sm:$0xf]
  %v705 = vld [vmem:[%s3 + $0x7c] sm:$0xf]
  %v706 = vld [vmem:[%s3 + $0x80] sm:$0xf]
  %v707 = vld [vmem:[%s3 + $0x84] sm:$0xf]
  %v708 = vld [vmem:[%s3 + $0x88] sm:$0xf]
  %v709 = vld [vmem:[%s3 + $0x8c] sm:$0xf]
  %v710 = vld [vmem:[%s3 + $0x90] sm:$0xf]
  %v711 = vld [vmem:[%s3 + $0x94] sm:$0xf]
  %v712 = vld [vmem:[%s3 + $0x98] sm:$0xf]
  %v713 = vld [vmem:[%s3 + $0x9c] sm:$0xf]
  %v714 = vld [vmem:[%s3 + $0xa0] sm:$0xf]
  %v715 = vld [vmem:[%s3 + $0xa4] sm:$0xf]
  %v716 = vld [vmem:[%s3 + $0xa8] sm:$0xf]
  %v717 = vld [vmem:[%s3 + $0xac] sm:$0xf]
  %v718 = vld [vmem:[%s3 + $0xb0] sm:$0xf]
  %v719 = vld [vmem:[%s3 + $0xb4] sm:$0xf]
  %v720 = vld [vmem:[%s3 + $0xb8] sm:$0xf]
  %v721 = vld [vmem:[%s3 + $0xbc] sm:$0xf]
  %v722 = vld [vmem:[%s3 + $0xc0] sm:$0xf]
  %v723 = vld [vmem:[%s3 + $0xc4] sm:$0xf]
  %v724 = vld [vmem:[%s3 + $0xc8] sm:$0xf]
  %v725 = vld [vmem:[%s3 + $0xcc] sm:$0xf]
  %v726 = vld [vmem:[%s3 + $0xd0] sm:$0xf]
  %v727 = vld [vmem:[%s3 + $0xd4] sm:$0xf]
  %v728 = vld [vmem:[%s3 + $0xd8] sm:$0xf]
  %v729 = vld [vmem:[%s3 + $0xdc] sm:$0xf]
  %v730 = vld [vmem:[%s3 + $0xe0] sm:$0xf]
  %v731 = vld [vmem:[%s3 + $0xe4] sm:$0xf]
  %v732 = vld [vmem:[%s3 + $0xe8] sm:$0xf]
  %v733 = vld [vmem:[%s3 + $0xec] sm:$0xf]
  %v734 = vld [vmem:[%s3 + $0xf0] sm:$0xf]
  %v735 = vld [vmem:[%s3 + $0xf4] sm:$0xf]
  %v736 = vld [vmem:[%s3 + $0xf8] sm:$0xf]
  %v737 = vld [vmem:[%s3 + $0xfc] sm:$0xf]
  %v738 = vld [vmem:[%s3 + $0x100] sm:$0xf]
  %v739 = vld [vmem:[%s3 + $0x104] sm:$0xf]
  %v740 = vld [vmem:[%s3 + $0x108] sm:$0xf]
  %v741 = vld [vmem:[%s3 + $0x10c] sm:$0xf]
  %v742 = vld [vmem:[%s3 + $0x110] sm:$0xf]
  %v743 = vld [vmem:[%s3 + $0x114] sm:$0xf]
  %v744 = vld [vmem:[%s3 + $0x118] sm:$0xf]
  %v745 = vld [vmem:[%s3 + $0x11c] sm:$0xf]
  %v746 = vld [vmem:[%s3 + $0x120] sm:$0xf]
  %v747 = vld [vmem:[%s3 + $0x124] sm:$0xf]
  %v748 = vld [vmem:[%s3 + $0x128] sm:$0xf]
  %v749 = vld [vmem:[%s3 + $0x12c] sm:$0xf]
  %v750 = vld [vmem:[%s3 + $0x130] sm:$0xf]
  %v751 = vld [vmem:[%s3 + $0x134] sm:$0xf]
  %v752 = vld [vmem:[%s3 + $0x138] sm:$0xf]
  %v753 = vld [vmem:[%s3 + $0x13c] sm:$0xf]
  %v754 = vld [vmem:[%s4] sm:$0x1]
  %v756 = vlaneseq
  %v757 = vshrl.u32 %v756, 7
  %v758 = vsub.s32 0, %v757
  %v759 = vrot.slane %v754, %v758
  %v841 = vunpack.c.l.b16 %v674
  %v842 = vunpack.c.l.b16 %v675
  %v843 = vunpack.c.l.b16 %v676
  %v844 = vunpack.c.l.b16 %v677
  %v845 = vunpack.c.l.b16 %v678
  %v846 = vunpack.c.l.b16 %v679
  %v847 = vunpack.c.l.b16 %v680
  %v848 = vunpack.c.l.b16 %v681
  %v849 = vunpack.c.l.b16 %v682
  %v850 = vunpack.c.l.b16 %v683
  %v851 = vunpack.c.l.b16 %v684
  %v852 = vunpack.c.l.b16 %v685
  %v853 = vunpack.c.l.b16 %v686
  %v854 = vunpack.c.l.b16 %v687
  %v855 = vunpack.c.l.b16 %v688
  %v856 = vunpack.c.l.b16 %v689
  %v857 = vunpack.c.l.b16 %v690
  %v858 = vunpack.c.l.b16 %v691
  %v859 = vunpack.c.l.b16 %v692
  %v860 = vunpack.c.l.b16 %v693
  %v861 = vunpack.c.l.b16 %v694
  %v862 = vunpack.c.l.b16 %v695
  %v863 = vunpack.c.l.b16 %v696
  %v864 = vunpack.c.l.b16 %v697
  %v865 = vunpack.c.l.b16 %v698
  %v866 = vunpack.c.l.b16 %v699
  %v867 = vunpack.c.l.b16 %v700
  %v868 = vunpack.c.l.b16 %v701
  %v869 = vunpack.c.l.b16 %v702
  %v870 = vunpack.c.l.b16 %v703
  %v871 = vunpack.c.l.b16 %v704
  %v872 = vunpack.c.l.b16 %v705
  %v873 = vunpack.c.l.b16 %v706
  %v874 = vunpack.c.l.b16 %v707
  %v875 = vunpack.c.l.b16 %v708
  %v876 = vunpack.c.l.b16 %v709
  %v877 = vunpack.c.l.b16 %v710
  %v878 = vunpack.c.l.b16 %v711
  %v879 = vunpack.c.l.b16 %v712
  %v880 = vunpack.c.l.b16 %v713
  %v881 = vunpack.c.l.b16 %v714
  %v882 = vunpack.c.l.b16 %v715
  %v883 = vunpack.c.l.b16 %v716
  %v884 = vunpack.c.l.b16 %v717
  %v885 = vunpack.c.l.b16 %v718
  %v886 = vunpack.c.l.b16 %v719
  %v887 = vunpack.c.l.b16 %v720
  %v888 = vunpack.c.l.b16 %v721
  %v889 = vunpack.c.l.b16 %v722
  %v890 = vunpack.c.l.b16 %v723
  %v891 = vunpack.c.l.b16 %v724
  %v892 = vunpack.c.l.b16 %v725
  %v893 = vunpack.c.l.b16 %v726
  %v894 = vunpack.c.l.b16 %v727
  %v895 = vunpack.c.l.b16 %v728
  %v896 = vunpack.c.l.b16 %v729
  %v897 = vunpack.c.l.b16 %v730
  %v898 = vunpack.c.l.b16 %v731
  %v899 = vunpack.c.l.b16 %v732
  %v900 = vunpack.c.l.b16 %v733
  %v901 = vunpack.c.l.b16 %v734
  %v902 = vunpack.c.l.b16 %v735
  %v903 = vunpack.c.l.b16 %v736
  %v904 = vunpack.c.l.b16 %v737
  %v905 = vunpack.c.l.b16 %v738
  %v906 = vunpack.c.l.b16 %v739
  %v907 = vunpack.c.l.b16 %v740
  %v908 = vunpack.c.l.b16 %v741
  %v909 = vunpack.c.l.b16 %v742
  %v910 = vunpack.c.l.b16 %v743
  %v911 = vunpack.c.l.b16 %v744
  %v912 = vunpack.c.l.b16 %v745
  %v913 = vunpack.c.l.b16 %v746
  %v914 = vunpack.c.l.b16 %v747
  %v915 = vunpack.c.l.b16 %v748
  %v916 = vunpack.c.l.b16 %v749
  %v917 = vunpack.c.l.b16 %v750
  %v918 = vunpack.c.l.b16 %v751
  %v919 = vunpack.c.l.b16 %v752
  %v920 = vunpack.c.l.b16 %v753
  %v921 = vpack.c.b16 %v842, %v841
  %v922 = vpack.c.b16 %v844, %v843
  %v923 = vpack.c.b16 %v846, %v845
  %v924 = vpack.c.b16 %v848, %v847
  %v925 = vpack.c.b16 %v850, %v849
  %v926 = vpack.c.b16 %v852, %v851
  %v927 = vpack.c.b16 %v854, %v853
  %v928 = vpack.c.b16 %v856, %v855
  %v929 = vpack.c.b16 %v858, %v857
  %v930 = vpack.c.b16 %v860, %v859
  %v931 = vpack.c.b16 %v862, %v861
  %v932 = vpack.c.b16 %v864, %v863
  %v933 = vpack.c.b16 %v866, %v865
  %v934 = vpack.c.b16 %v868, %v867
  %v935 = vpack.c.b16 %v870, %v869
  %v936 = vpack.c.b16 %v872, %v871
  %v937 = vpack.c.b16 %v874, %v873
  %v938 = vpack.c.b16 %v876, %v875
  %v939 = vpack.c.b16 %v878, %v877
  %v940 = vpack.c.b16 %v880, %v879
  %v941 = vpack.c.b16 %v882, %v881
  %v942 = vpack.c.b16 %v884, %v883
  %v943 = vpack.c.b16 %v886, %v885
  %v944 = vpack.c.b16 %v888, %v887
  %v945 = vpack.c.b16 %v890, %v889
  %v946 = vpack.c.b16 %v892, %v891
  %v947 = vpack.c.b16 %v894, %v893
  %v948 = vpack.c.b16 %v896, %v895
  %v949 = vpack.c.b16 %v898, %v897
  %v950 = vpack.c.b16 %v900, %v899
  %v951 = vpack.c.b16 %v902, %v901
  %v952 = vpack.c.b16 %v904, %v903
  %v953 = vpack.c.b16 %v906, %v905
  %v954 = vpack.c.b16 %v908, %v907
  %v955 = vpack.c.b16 %v910, %v909
  %v956 = vpack.c.b16 %v912, %v911
  %v957 = vpack.c.b16 %v914, %v913
  %v958 = vpack.c.b16 %v916, %v915
  %v959 = vpack.c.b16 %v918, %v917
  %v960 = vpack.c.b16 %v920, %v919
  %1001 = vmatprep.subr.bf16.mxu0 0
  %1002 = vmatpush1.bf16.msra.mxu0 %v921
  %1003 = vmatprep.subr.bf16.mxu0 0
  %1004 = vmatpush1.bf16.msra.mxu0 %v922
  %1005 = vmatprep.subr.bf16.mxu0 0
  %1006 = vmatpush1.bf16.msra.mxu0 %v923
  %1007 = vmatprep.subr.bf16.mxu0 0
  %1008 = vmatpush1.bf16.msra.mxu0 %v924
  %1009 = vmatprep.subr.bf16.mxu0 0
  %1010 = vmatpush1.bf16.msra.mxu0 %v925
  %1011 = vmatprep.subr.bf16.mxu0 0
  %1012 = vmatpush1.bf16.msra.mxu0 %v926
  %1013 = vmatprep.subr.bf16.mxu0 0
  %1014 = vmatpush1.bf16.msra.mxu0 %v927
  %1015 = vmatprep.subr.bf16.mxu0 0
  %1016 = vmatpush1.bf16.msra.mxu0 %v928
  %1017 = vmatprep.subr.bf16.mxu0 0
  %1018 = vmatpush1.bf16.msra.mxu0 %v929
  %1019 = vmatprep.subr.bf16.mxu0 0
  %1020 = vmatpush1.bf16.msra.mxu0 %v930
  %1021 = vmatprep.subr.bf16.mxu0 0
  %1022 = vmatpush1.bf16.msra.mxu0 %v931
  %1023 = vmatprep.subr.bf16.mxu0 0
  %1024 = vmatpush1.bf16.msra.mxu0 %v932
  %1025 = vmatprep.subr.bf16.mxu0 0
  %1026 = vmatpush1.bf16.msra.mxu0 %v933
  %1027 = vmatprep.subr.bf16.mxu0 0
  %1028 = vmatpush1.bf16.msra.mxu0 %v934
  %1029 = vmatprep.subr.bf16.mxu0 0
  %1030 = vmatpush1.bf16.msra.mxu0 %v935
  %1031 = vmatprep.subr.bf16.mxu0 0
  %1032 = vmatpush1.bf16.msra.mxu0 %v936
  %1033 = vmatprep.mubr.bf16.mxu0 %v627
  %1034 = vmatmul.mubr.bf16.gmra.mrb[0].mxu0 %v611
  %v1035 = vpop.f32.mrb[0].mxu0
  %v1036 = vadd.f32 %v759, %v1035
  %v1037 = vpop.f32.mrb[0].mxu0
  %v1038 = vpop.f32.mrb[0].mxu0
  %v1039 = vadd.f32 %v759, %v1038
  %v1040 = vpop.f32.mrb[0].mxu0
  %1041 = vmatprep.mubr.bf16.mxu0 %v630
  %1042 = vmatmul.mubr.bf16.gmra.mrb[0].mxu0 %v615
  %v1043 = vpop.f32.mrb[0].mxu0
  %v1044 = vadd.f32 %v759, %v1043
  %v1045 = vpop.f32.mrb[0].mxu0
  %v1046 = vpop.f32.mrb[0].mxu0
  %v1047 = vadd.f32 %v759, %v1046
  %v1048 = vpop.f32.mrb[0].mxu0
  %1049 = vmatprep.mubr.bf16.mxu0 %v634
  %1050 = vmatmul.mubr.bf16.gmra.mrb[0].mxu0 %v619
  %v1051 = vpop.f32.mrb[0].mxu0
  %v1052 = vadd.f32 %v759, %v1051
  %v1053 = vpop.f32.mrb[0].mxu0
  %v1054 = vpop.f32.mrb[0].mxu0
  %v1055 = vadd.f32 %v759, %v1054
  %v1056 = vpop.f32.mrb[0].mxu0
  %1057 = vmatprep.mubr.bf16.mxu0 %v638
  %1058 = vmatmul.mubr.bf16.gmra.mrb[0].mxu0 %v623
  %v1059 = vpop.f32.mrb[0].mxu0
  %v1060 = vadd.f32 %v759, %v1059
  %v1061 = vpop.f32.mrb[0].mxu0
  %v1062 = vpop.f32.mrb[0].mxu0
  %v1063 = vadd.f32 %v759, %v1062
  %v1064 = vpop.f32.mrb[0].mxu0
  %1065 = vdwg.mxu0
  %1066 = vmatprep.subr.bf16.mxu0 0
  %1067 = vmatpush1.bf16.msra.mxu0 %v937
  %1068 = vmatprep.subr.bf16.mxu0 0
  %1069 = vmatpush1.bf16.msra.mxu0 %v938
  %1070 = vmatprep.subr.bf16.mxu0 0
  %1071 = vmatpush1.bf16.msra.mxu0 %v939
  %1072 = vmatprep.subr.bf16.mxu0 0
  %1073 = vmatpush1.bf16.msra.mxu0 %v940
  %1074 = vmatprep.subr.bf16.mxu0 0
  %1075 = vmatpush1.bf16.msra.mxu0 %v941
  %1076 = vmatprep.subr.bf16.mxu0 0
  %1077 = vmatpush1.bf16.msra.mxu0 %v942
  %1078 = vmatprep.subr.bf16.mxu0 0
  %1079 = vmatpush1.bf16.msra.mxu0 %v943
  %1080 = vmatprep.subr.bf16.mxu0 0
  %1081 = vmatpush1.bf16.msra.mxu0 %v944
  %1082 = vmatprep.subr.bf16.mxu0 0
  %1083 = vmatpush1.bf16.msra.mxu0 %v945
  %1084 = vmatprep.subr.bf16.mxu0 0
  %1085 = vmatpush1.bf16.msra.mxu0 %v946
  %1086 = vmatprep.subr.bf16.mxu0 0
  %1087 = vmatpush1.bf16.msra.mxu0 %v947
  %1088 = vmatprep.subr.bf16.mxu0 0
  %1089 = vmatpush1.bf16.msra.mxu0 %v948
  %1090 = vmatprep.subr.bf16.mxu0 0
  %1091 = vmatpush1.bf16.msra.mxu0 %v949
  %1092 = vmatprep.subr.bf16.mxu0 0
  %1093 = vmatpush1.bf16.msra.mxu0 %v950
  %1094 = vmatprep.subr.bf16.mxu0 0
  %1095 = vmatpush1.bf16.msra.mxu0 %v951
  %1096 = vmatprep.subr.bf16.mxu0 0
  %1097 = vmatpush1.bf16.msra.mxu0 %v952
  %1098 = vmatprep.mubr.bf16.mxu0 %v652
  %1099 = vmatmul.mubr.bf16.gmra.mrb[0].mxu0 %v623
  %v1100 = vpop.f32.mrb[0].mxu0
  %v1101 = vadd.f32 %v1036, %v1100
  %v1102 = vpop.f32.mrb[0].mxu0
  %v1103 = vpop.f32.mrb[0].mxu0
  %v1104 = vadd.f32 %v1039, %v1103
  %v1105 = vpop.f32.mrb[0].mxu0
  %1106 = vmatprep.mubr.bf16.mxu0 %v645
  %1107 = vmatmul.mubr.bf16.gmra.mrb[0].mxu0 %v641
  %v1108 = vpop.f32.mrb[0].mxu0
  %v1109 = vadd.f32 %v1044, %v1108
  %v1110 = vpop.f32.mrb[0].mxu0
  %v1111 = vpop.f32.mrb[0].mxu0
  %v1112 = vadd.f32 %v1047, %v1111
  %v1113 = vpop.f32.mrb[0].mxu0
  %1114 = vmatprep.mubr.bf16.mxu0 %v656
  %1115 = vmatmul.mubr.bf16.gmra.mrb[0].mxu0 %v645
  %v1116 = vpop.f32.mrb[0].mxu0
  %v1117 = vadd.f32 %v1052, %v1116
  %v1118 = vpop.f32.mrb[0].mxu0
  %v1119 = vpop.f32.mrb[0].mxu0
  %v1120 = vadd.f32 %v1055, %v1119
  %v1121 = vpop.f32.mrb[0].mxu0
  %1122 = vmatprep.mubr.bf16.mxu0 %v660
  %1123 = vmatmul.mubr.bf16.gmra.mrb[0].mxu0 %v649
  %v1124 = vpop.f32.mrb[0].mxu0
  %v1125 = vadd.f32 %v1060, %v1124
  %v1126 = vpop.f32.mrb[0].mxu0
  %v1127 = vpop.f32.mrb[0].mxu0
  %v1128 = vadd.f32 %v1063, %v1127
  %v1129 = vpop.f32.mrb[0].mxu0
  %1130 = vdwg.mxu0
  %1131 = vmatprep.subr.bf16.mxu0 0
  %1132 = vmatpush1.bf16.msra.mxu0 %v953
  %1133 = vmatprep.subr.bf16.mxu0 0
  %1134 = vmatpush1.bf16.msra.mxu0 %v954
  %1135 = vmatprep.subr.bf16.mxu0 0
  %1136 = vmatpush1.bf16.msra.mxu0 %v955
  %1137 = vmatprep.subr.bf16.mxu0 0
  %1138 = vmatpush1.bf16.msra.mxu0 %v956
  %1139 = vmatprep.subr.bf16.mxu0 0
  %1140 = vmatpush1.bf16.msra.mxu0 %v957
  %1141 = vmatprep.subr.bf16.mxu0 0
  %1142 = vmatpush1.bf16.msra.mxu0 %v958
  %1143 = vmatprep.subr.bf16.mxu0 0
  %1144 = vmatpush1.bf16.msra.mxu0 %v959
  %1145 = vmatprep.subr.bf16.mxu0 0
  %1146 = vmatpush1.bf16.msra.mxu0 %v960
  %1147 = vmatprep.subr.bf16.mxu0 0
  %1148 = vmatpush1.bf16.msra.mxu0 0
  %1149 = vmatprep.subr.bf16.mxu0 0
  %1150 = vmatpush1.bf16.msra.mxu0 0
  %1151 = vmatprep.subr.bf16.mxu0 0
  %1152 = vmatpush1.bf16.msra.mxu0 0
  %1153 = vmatprep.subr.bf16.mxu0 0
  %1154 = vmatpush1.bf16.msra.mxu0 0
  %1155 = vmatprep.subr.bf16.mxu0 0
  %1156 = vmatpush1.bf16.msra.mxu0 0
  %1157 = vmatprep.subr.bf16.mxu0 0
  %1158 = vmatpush1.bf16.msra.mxu0 0
  %1159 = vmatprep.subr.bf16.mxu0 0
  %1160 = vmatpush1.bf16.msra.mxu0 0
  %1161 = vmatprep.subr.bf16.mxu0 0
  %1162 = vmatpush1.bf16.msra.mxu0 0
  %1163 = vmatprep.mubr.bf16.mxu0 0
  %1164 = vmatmul.mubr.bf16.gmra.mrb[0].mxu0 %v663
  %v1165 = vpop.f32.mrb[0].mxu0
  %v1166 = vadd.f32 %v1101, %v1165
  %v1167 = vpop.f32.mrb[0].mxu0
  %v1168 = vpop.f32.mrb[0].mxu0
  %v1169 = vadd.f32 %v1104, %v1168
  %v1170 = vpop.f32.mrb[0].mxu0
  %1171 = vmatprep.mubr.bf16.mxu0 0
  %1172 = vmatmul.mubr.bf16.gmra.mrb[0].mxu0 %v666
  %v1173 = vpop.f32.mrb[0].mxu0
  %v1174 = vadd.f32 %v1109, %v1173
  %v1175 = vpop.f32.mrb[0].mxu0
  %v1176 = vpop.f32.mrb[0].mxu0
  %v1177 = vadd.f32 %v1112, %v1176
  %v1178 = vpop.f32.mrb[0].mxu0
  %1179 = vmatprep.mubr.bf16.mxu0 0
  %1180 = vmatmul.mubr.bf16.gmra.mrb[0].mxu0 %v669
  %v1181 = vpop.f32.mrb[0].mxu0
  %v1182 = vadd.f32 %v1117, %v1181
  %v1183 = vpop.f32.mrb[0].mxu0
  %v1184 = vpop.f32.mrb[0].mxu0
  %v1185 = vadd.f32 %v1120, %v1184
  %v1186 = vpop.f32.mrb[0].mxu0
  %1187 = vmatprep.mubr.bf16.mxu0 0
  %1188 = vmatmul.mubr.bf16.gmra.mrb[0].mxu0 %v672
  %v1189 = vpop.f32.mrb[0].mxu0
  %v1190 = vadd.f32 %v1125, %v1189
  %v1191 = vpop.f32.mrb[0].mxu0
  %v1192 = vpop.f32.mrb[0].mxu0
  %v1193 = vadd.f32 %v1128, %v1192
  %v1194 = vpop.f32.mrb[0].mxu0
  %1195 = vdwg.mxu0
  %v1196 = vmax.f32 %v1166, 0.0
  %v1197 = vmax.f32 %v1169, 0.0
  %v1198 = vmax.f32 %v1174, 0.0
  %v1199 = vmax.f32 %v1177, 0.0
  %v1200 = vmax.f32 %v1182, 0.0
  %v1201 = vmax.f32 %v1185, 0.0
  %v1202 = vmax.f32 %v1190, 0.0
  %v1203 = vmax.f32 %v1193, 0.0
  %v1204 = vpack.c.bf16 %v1197, %v1196
  %v1205 = vpack.c.bf16 %v1199, %v1198
  %v1206 = vpack.c.bf16 %v1201, %v1200
  %v1207 = vpack.c.bf16 %v1203, %v1202
  %1209 = vrot.lane.b32.xlu0 %v1205, 64
  %v1210 = vpop.permute.xlu0 %1209
  %1212 = vrot.lane.b32.xlu0 %v1207, 64
  %v1213 = vpop.permute.xlu0 %1212
  %v1216 = vsel %vm608, %v1204, %v1210
  %v1220 = vsel %vm608, %v1206, %v1213
  %v1222 = vld [vmem:[%s5] sm:$0xf]
  %v1223 = vld [vmem:[%s5 + $0x4] sm:$0xf]
  %v1226 = vunpack.c.l.b16 %v1222
  %v1227 = vunpack.c.l.b16 %v1223
  %v1228 = vpack.c.b16 %v1227, %v1226
  %v1230 = vld [vmem:[%s6] sm:$0xff]
  %v1231 = vld [vmem:[%s6 + $0x8] sm:$0xff]
  %v1232 = vld [vmem:[%s6 + $0x10] sm:$0xff]
  %v1233 = vld [vmem:[%s6 + $0x18] sm:$0xff]
  %v1234 = vld [vmem:[%s6 + $0x20] sm:$0xff]
  %v1235 = vld [vmem:[%s6 + $0x28] sm:$0xff]
  %v1236 = vld [vmem:[%s6 + $0x30] sm:$0xff]
  %v1237 = vld [vmem:[%s6 + $0x38] sm:$0xff]
  %v1238 = vld [vmem:[%s6 + $0x40] sm:$0xff]
  %v1239 = vld [vmem:[%s6 + $0x48] sm:$0xff]
  %v1240 = vld [vmem:[%s6 + $0x50] sm:$0xff]
  %v1241 = vld [vmem:[%s6 + $0x58] sm:$0xff]
  %v1242 = vld [vmem:[%s6 + $0x60] sm:$0xff]
  %v1243 = vld [vmem:[%s6 + $0x68] sm:$0xff]
  %v1244 = vld [vmem:[%s6 + $0x70] sm:$0xff]
  %v1245 = vld [vmem:[%s6 + $0x78] sm:$0xff]
  %v1246 = vld [vmem:[%s6 + $0x80] sm:$0xff]
  %v1247 = vld [vmem:[%s6 + $0x88] sm:$0xff]
  %v1248 = vld [vmem:[%s6 + $0x90] sm:$0xff]
  %v1249 = vld [vmem:[%s6 + $0x98] sm:$0xff]
  %v1250 = vld [vmem:[%s6 + $0xa0] sm:$0xff]
  %v1251 = vld [vmem:[%s6 + $0xa8] sm:$0xff]
  %v1252 = vld [vmem:[%s6 + $0xb0] sm:$0xff]
  %v1253 = vld [vmem:[%s6 + $0xb8] sm:$0xff]
  %v1254 = vld [vmem:[%s6 + $0xc0] sm:$0xff]
  %v1255 = vld [vmem:[%s6 + $0xc8] sm:$0xff]
  %v1256 = vld [vmem:[%s6 + $0xd0] sm:$0xff]
  %v1257 = vld [vmem:[%s6 + $0xd8] sm:$0xff]
  %v1258 = vld [vmem:[%s6 + $0xe0] sm:$0xff]
  %v1259 = vld [vmem:[%s6 + $0xe8] sm:$0xff]
  %v1260 = vld [vmem:[%s6 + $0xf0] sm:$0xff]
  %v1261 = vld [vmem:[%s6 + $0xf8] sm:$0xff]
  %v1262 = vld [vmem:[%s6 + $0x100] sm:$0xff]
  %v1263 = vld [vmem:[%s6 + $0x108] sm:$0xff]
  %v1264 = vld [vmem:[%s6 + $0x110] sm:$0xff]
  %v1265 = vld [vmem:[%s6 + $0x118] sm:$0xff]
  %v1266 = vld [vmem:[%s6 + $0x120] sm:$0xff]
  %v1267 = vld [vmem:[%s6 + $0x128] sm:$0xff]
  %v1268 = vld [vmem:[%s6 + $0x130] sm:$0xff]
  %v1269 = vld [vmem:[%s6 + $0x138] sm:$0xff]
  %v1270 = vld [vmem:[%s6 + $0x140] sm:$0xff]
  %v1271 = vld [vmem:[%s6 + $0x148] sm:$0xff]
  %v1272 = vld [vmem:[%s6 + $0x150] sm:$0xff]
  %v1273 = vld [vmem:[%s6 + $0x158] sm:$0xff]
  %v1274 = vld [vmem:[%s6 + $0x160] sm:$0xff]
  %v1275 = vld [vmem:[%s6 + $0x168] sm:$0xff]
  %v1276 = vld [vmem:[%s6 + $0x170] sm:$0xff]
  %v1277 = vld [vmem:[%s6 + $0x178] sm:$0xff]
  %v1278 = vld [vmem:[%s7] sm:$0x3]
  %v1280 = vlaneseq
  %v1281 = vshrl.u32 %v1280, 7
  %v1282 = vsub.s32 0, %v1281
  %v1283 = vrot.slane %v1278, %v1282
  %v1284 = vlaneseq
  %v1285 = vshrl.u32 %v1284, 7
  %v1286 = vsub.s32 1, %v1285
  %v1287 = vrot.slane %v1278, %v1286
  %v1338 = vunpack.c.l.b16 %v1230
  %v1339 = vunpack.c.h.b16 %v1230
  %v1340 = vunpack.c.l.b16 %v1231
  %v1341 = vunpack.c.h.b16 %v1231
  %v1342 = vunpack.c.l.b16 %v1232
  %v1343 = vunpack.c.h.b16 %v1232
  %v1344 = vunpack.c.l.b16 %v1233
  %v1345 = vunpack.c.h.b16 %v1233
  %v1346 = vunpack.c.l.b16 %v1234
  %v1347 = vunpack.c.h.b16 %v1234
  %v1348 = vunpack.c.l.b16 %v1235
  %v1349 = vunpack.c.h.b16 %v1235
  %v1350 = vunpack.c.l.b16 %v1236
  %v1351 = vunpack.c.h.b16 %v1236
  %v1352 = vunpack.c.l.b16 %v1237
  %v1353 = vunpack.c.h.b16 %v1237
  %v1354 = vunpack.c.l.b16 %v1238
  %v1355 = vunpack.c.h.b16 %v1238
  %v1356 = vunpack.c.l.b16 %v1239
  %v1357 = vunpack.c.h.b16 %v1239
  %v1358 = vunpack.c.l.b16 %v1240
  %v1359 = vunpack.c.h.b16 %v1240
  %v1360 = vunpack.c.l.b16 %v1241
  %v1361 = vunpack.c.h.b16 %v1241
  %v1362 = vunpack.c.l.b16 %v1242
  %v1363 = vunpack.c.h.b16 %v1242
  %v1364 = vunpack.c.l.b16 %v1243
  %v1365 = vunpack.c.h.b16 %v1243
  %v1366 = vunpack.c.l.b16 %v1244
  %v1367 = vunpack.c.h.b16 %v1244
  %v1368 = vunpack.c.l.b16 %v1245
  %v1369 = vunpack.c.h.b16 %v1245
  %v1370 = vunpack.c.l.b16 %v1246
  %v1371 = vunpack.c.h.b16 %v1246
  %v1372 = vunpack.c.l.b16 %v1247
  %v1373 = vunpack.c.h.b16 %v1247
  %v1374 = vunpack.c.l.b16 %v1248
  %v1375 = vunpack.c.h.b16 %v1248
  %v1376 = vunpack.c.l.b16 %v1249
  %v1377 = vunpack.c.h.b16 %v1249
  %v1378 = vunpack.c.l.b16 %v1250
  %v1379 = vunpack.c.h.b16 %v1250
  %v1380 = vunpack.c.l.b16 %v1251
  %v1381 = vunpack.c.h.b16 %v1251
  %v1382 = vunpack.c.l.b16 %v1252
  %v1383 = vunpack.c.h.b16 %v1252
  %v1384 = vunpack.c.l.b16 %v1253
  %v1385 = vunpack.c.h.b16 %v1253
  %v1386 = vunpack.c.l.b16 %v1254
  %v1387 = vunpack.c.h.b16 %v1254
  %v1388 = vunpack.c.l.b16 %v1255
  %v1389 = vunpack.c.h.b16 %v1255
  %v1390 = vunpack.c.l.b16 %v1256
  %v1391 = vunpack.c.h.b16 %v1256
  %v1392 = vunpack.c.l.b16 %v1257
  %v1393 = vunpack.c.h.b16 %v1257
  %v1394 = vunpack.c.l.b16 %v1258
  %v1395 = vunpack.c.h.b16 %v1258
  %v1396 = vunpack.c.l.b16 %v1259
  %v1397 = vunpack.c.h.b16 %v1259
  %v1398 = vunpack.c.l.b16 %v1260
  %v1399 = vunpack.c.h.b16 %v1260
  %v1400 = vunpack.c.l.b16 %v1261
  %v1401 = vunpack.c.h.b16 %v1261
  %v1402 = vunpack.c.l.b16 %v1262
  %v1403 = vunpack.c.h.b16 %v1262
  %v1404 = vunpack.c.l.b16 %v1263
  %v1405 = vunpack.c.h.b16 %v1263
  %v1406 = vunpack.c.l.b16 %v1264
  %v1407 = vunpack.c.h.b16 %v1264
  %v1408 = vunpack.c.l.b16 %v1265
  %v1409 = vunpack.c.h.b16 %v1265
  %v1410 = vunpack.c.l.b16 %v1266
  %v1411 = vunpack.c.h.b16 %v1266
  %v1412 = vunpack.c.l.b16 %v1267
  %v1413 = vunpack.c.h.b16 %v1267
  %v1414 = vunpack.c.l.b16 %v1268
  %v1415 = vunpack.c.h.b16 %v1268
  %v1416 = vunpack.c.l.b16 %v1269
  %v1417 = vunpack.c.h.b16 %v1269
  %v1418 = vunpack.c.l.b16 %v1270
  %v1419 = vunpack.c.h.b16 %v1270
  %v1420 = vunpack.c.l.b16 %v1271
  %v1421 = vunpack.c.h.b16 %v1271
  %v1422 = vunpack.c.l.b16 %v1272
  %v1423 = vunpack.c.h.b16 %v1272
  %v1424 = vunpack.c.l.b16 %v1273
  %v1425 = vunpack.c.h.b16 %v1273
  %v1426 = vunpack.c.l.b16 %v1274
  %v1427 = vunpack.c.h.b16 %v1274
  %v1428 = vunpack.c.l.b16 %v1275
  %v1429 = vunpack.c.h.b16 %v1275
  %v1430 = vunpack.c.l.b16 %v1276
  %v1431 = vunpack.c.h.b16 %v1276
  %v1432 = vunpack.c.l.b16 %v1277
  %v1433 = vunpack.c.h.b16 %v1277
  %v1434 = vpack.c.b16 %v1340, %v1338
  %v1435 = vpack.c.b16 %v1341, %v1339
  %v1436 = vpack.c.b16 %v1344, %v1342
  %v1437 = vpack.c.b16 %v1345, %v1343
  %v1438 = vpack.c.b16 %v1348, %v1346
  %v1439 = vpack.c.b16 %v1349, %v1347
  %v1440 = vpack.c.b16 %v1352, %v1350
  %v1441 = vpack.c.b16 %v1353, %v1351
  %v1442 = vpack.c.b16 %v1356, %v1354
  %v1443 = vpack.c.b16 %v1357, %v1355
  %v1444 = vpack.c.b16 %v1360, %v1358
  %v1445 = vpack.c.b16 %v1361, %v1359
  %v1446 = vpack.c.b16 %v1364, %v1362
  %v1447 = vpack.c.b16 %v1365, %v1363
  %v1448 = vpack.c.b16 %v1368, %v1366
  %v1449 = vpack.c.b16 %v1369, %v1367
  %v1450 = vpack.c.b16 %v1372, %v1370
  %v1451 = vpack.c.b16 %v1373, %v1371
  %v1452 = vpack.c.b16 %v1376, %v1374
  %v1453 = vpack.c.b16 %v1377, %v1375
  %v1454 = vpack.c.b16 %v1380, %v1378
  %v1455 = vpack.c.b16 %v1381, %v1379
  %v1456 = vpack.c.b16 %v1384, %v1382
  %v1457 = vpack.c.b16 %v1385, %v1383
  %v1458 = vpack.c.b16 %v1388, %v1386
  %v1459 = vpack.c.b16 %v1389, %v1387
  %v1460 = vpack.c.b16 %v1392, %v1390
  %v1461 = vpack.c.b16 %v1393, %v1391
  %v1462 = vpack.c.b16 %v1396, %v1394
  %v1463 = vpack.c.b16 %v1397, %v1395
  %v1464 = vpack.c.b16 %v1400, %v1398
  %v1465 = vpack.c.b16 %v1401, %v1399
  %v1466 = vpack.c.b16 %v1404, %v1402
  %v1467 = vpack.c.b16 %v1405, %v1403
  %v1468 = vpack.c.b16 %v1408, %v1406
  %v1469 = vpack.c.b16 %v1409, %v1407
  %v1470 = vpack.c.b16 %v1412, %v1410
  %v1471 = vpack.c.b16 %v1413, %v1411
  %v1472 = vpack.c.b16 %v1416, %v1414
  %v1473 = vpack.c.b16 %v1417, %v1415
  %v1474 = vpack.c.b16 %v1420, %v1418
  %v1475 = vpack.c.b16 %v1421, %v1419
  %v1476 = vpack.c.b16 %v1424, %v1422
  %v1477 = vpack.c.b16 %v1425, %v1423
  %v1478 = vpack.c.b16 %v1428, %v1426
  %v1479 = vpack.c.b16 %v1429, %v1427
  %v1480 = vpack.c.b16 %v1432, %v1430
  %v1481 = vpack.c.b16 %v1433, %v1431
  %1530 = vmatprep.subr.bf16.mxu0 %v1435
  %1531 = vmatpush1.bf16.msra.mxu0 %v1434
  %1532 = vmatprep.subr.bf16.mxu0 %v1437
  %1533 = vmatpush1.bf16.msra.mxu0 %v1436
  %1534 = vmatprep.subr.bf16.mxu0 %v1439
  %1535 = vmatpush1.bf16.msra.mxu0 %v1438
  %1536 = vmatprep.subr.bf16.mxu0 %v1441
  %1537 = vmatpush1.bf16.msra.mxu0 %v1440
  %1538 = vmatprep.subr.bf16.mxu0 %v1443
  %1539 = vmatpush1.bf16.msra.mxu0 %v1442
  %1540 = vmatprep.subr.bf16.mxu0 %v1445
  %1541 = vmatpush1.bf16.msra.mxu0 %v1444
  %1542 = vmatprep.subr.bf16.mxu0 %v1447
  %1543 = vmatpush1.bf16.msra.mxu0 %v1446
  %1544 = vmatprep.subr.bf16.mxu0 %v1449
  %1545 = vmatpush1.bf16.msra.mxu0 %v1448
  %1546 = vmatprep.subr.bf16.mxu0 %v1451
  %1547 = vmatpush1.bf16.msra.mxu0 %v1450
  %1548 = vmatprep.subr.bf16.mxu0 %v1453
  %1549 = vmatpush1.bf16.msra.mxu0 %v1452
  %1550 = vmatprep.subr.bf16.mxu0 %v1455
  %1551 = vmatpush1.bf16.msra.mxu0 %v1454
  %1552 = vmatprep.subr.bf16.mxu0 %v1457
  %1553 = vmatpush1.bf16.msra.mxu0 %v1456
  %1554 = vmatprep.subr.bf16.mxu0 %v1459
  %1555 = vmatpush1.bf16.msra.mxu0 %v1458
  %1556 = vmatprep.subr.bf16.mxu0 %v1461
  %1557 = vmatpush1.bf16.msra.mxu0 %v1460
  %1558 = vmatprep.subr.bf16.mxu0 %v1463
  %1559 = vmatpush1.bf16.msra.mxu0 %v1462
  %1560 = vmatprep.subr.bf16.mxu0 %v1465
  %1561 = vmatpush1.bf16.msra.mxu0 %v1464
  %1562 = vmatprep.mubr.bf16.mxu0 %v1220
  %1563 = vmatmul.mubr.bf16.gmra.mrb[0].mxu0 %v1216
  %v1564 = vpop.f32.mrb[0].mxu0
  %v1565 = vadd.f32 %v1283, %v1564
  %v1566 = vpop.f32.mrb[0].mxu0
  %v1567 = vadd.f32 %v1287, %v1566
  %v1568 = vpop.f32.mrb[0].mxu0
  %v1569 = vadd.f32 %v1283, %v1568
  %v1570 = vpop.f32.mrb[0].mxu0
  %v1571 = vadd.f32 %v1287, %v1570
  %1572 = vdwg.mxu0
  %1573 = vmatprep.subr.bf16.mxu0 %v1467
  %1574 = vmatpush1.bf16.msra.mxu0 %v1466
  %1575 = vmatprep.subr.bf16.mxu0 %v1469
  %1576 = vmatpush1.bf16.msra.mxu0 %v1468
  %1577 = vmatprep.subr.bf16.mxu0 %v1471
  %1578 = vmatpush1.bf16.msra.mxu0 %v1470
  %1579 = vmatprep.subr.bf16.mxu0 %v1473
  %1580 = vmatpush1.bf16.msra.mxu0 %v1472
  %1581 = vmatprep.subr.bf16.mxu0 %v1475
  %1582 = vmatpush1.bf16.msra.mxu0 %v1474
  %1583 = vmatprep.subr.bf16.mxu0 %v1477
  %1584 = vmatpush1.bf16.msra.mxu0 %v1476
  %1585 = vmatprep.subr.bf16.mxu0 %v1479
  %1586 = vmatpush1.bf16.msra.mxu0 %v1478
  %1587 = vmatprep.subr.bf16.mxu0 %v1481
  %1588 = vmatpush1.bf16.msra.mxu0 %v1480
  %1589 = vmatprep.subr.bf16.mxu0 0
  %1590 = vmatpush1.bf16.msra.mxu0 0
  %1591 = vmatprep.subr.bf16.mxu0 0
  %1592 = vmatpush1.bf16.msra.mxu0 0
  %1593 = vmatprep.subr.bf16.mxu0 0
  %1594 = vmatpush1.bf16.msra.mxu0 0
  %1595 = vmatprep.subr.bf16.mxu0 0
  %1596 = vmatpush1.bf16.msra.mxu0 0
  %1597 = vmatprep.subr.bf16.mxu0 0
  %1598 = vmatpush1.bf16.msra.mxu0 0
  %1599 = vmatprep.subr.bf16.mxu0 0
  %1600 = vmatpush1.bf16.msra.mxu0 0
  %1601 = vmatprep.subr.bf16.mxu0 0
  %1602 = vmatpush1.bf16.msra.mxu0 0
  %1603 = vmatprep.subr.bf16.mxu0 0
  %1604 = vmatpush1.bf16.msra.mxu0 0
  %1605 = vmatprep.mubr.bf16.mxu0 0
  %1606 = vmatmul.mubr.bf16.gmra.mrb[0].mxu0 %v1228
  %v1607 = vpop.f32.mrb[0].mxu0
  %v1608 = vadd.f32 %v1565, %v1607
  %v1609 = vpop.f32.mrb[0].mxu0
  %v1610 = vadd.f32 %v1567, %v1609
  %v1611 = vpop.f32.mrb[0].mxu0
  %v1612 = vadd.f32 %v1569, %v1611
  %v1613 = vpop.f32.mrb[0].mxu0
  %v1614 = vadd.f32 %v1571, %v1613
  %1615 = vdwg.mxu0
  %v1616 = vmax.f32 %v1608, 0.0
  %v1617 = vmax.f32 %v1610, 0.0
  %v1618 = vmax.f32 %v1612, 0.0
  %v1619 = vmax.f32 %v1614, 0.0
  %v1620 = vpack.c.bf16 %v1618, %v1616
  %v1621 = vpack.c.bf16 %v1619, %v1617
  %v1622 = vld [vmem:[%s8] sm:$0xf]
  %v1623 = vld [vmem:[%s8 + $0x4] sm:$0xf]
  %v1624 = vld [vmem:[%s8 + $0x8] sm:$0xf]
  %v1625 = vld [vmem:[%s8 + $0xc] sm:$0xf]
  %v1626 = vld [vmem:[%s8 + $0x10] sm:$0xf]
  %v1627 = vld [vmem:[%s8 + $0x14] sm:$0xf]
  %v1628 = vld [vmem:[%s8 + $0x18] sm:$0xf]
  %v1629 = vld [vmem:[%s8 + $0x1c] sm:$0xf]
  %v1630 = vld [vmem:[%s8 + $0x20] sm:$0xf]
  %v1631 = vld [vmem:[%s8 + $0x24] sm:$0xf]
  %v1632 = vld [vmem:[%s8 + $0x28] sm:$0xf]
  %v1633 = vld [vmem:[%s8 + $0x2c] sm:$0xf]
  %v1634 = vld [vmem:[%s8 + $0x30] sm:$0xf]
  %v1635 = vld [vmem:[%s8 + $0x34] sm:$0xf]
  %v1636 = vld [vmem:[%s8 + $0x38] sm:$0xf]
  %v1637 = vld [vmem:[%s8 + $0x3c] sm:$0xf]
  %v1638 = vld [vmem:[%s8 + $0x40] sm:$0xf]
  %v1639 = vld [vmem:[%s8 + $0x44] sm:$0xf]
  %v1640 = vld [vmem:[%s8 + $0x48] sm:$0xf]
  %v1641 = vld [vmem:[%s8 + $0x4c] sm:$0xf]
  %v1642 = vld [vmem:[%s8 + $0x50] sm:$0xf]
  %v1643 = vld [vmem:[%s8 + $0x54] sm:$0xf]
  %v1644 = vld [vmem:[%s8 + $0x58] sm:$0xf]
  %v1645 = vld [vmem:[%s8 + $0x5c] sm:$0xf]
  %v1646 = vld [vmem:[%s8 + $0x60] sm:$0xf]
  %v1647 = vld [vmem:[%s8 + $0x64] sm:$0xf]
  %v1648 = vld [vmem:[%s8 + $0x68] sm:$0xf]
  %v1649 = vld [vmem:[%s8 + $0x6c] sm:$0xf]
  %v1650 = vld [vmem:[%s8 + $0x70] sm:$0xf]
  %v1651 = vld [vmem:[%s8 + $0x74] sm:$0xf]
  %v1652 = vld [vmem:[%s8 + $0x78] sm:$0xf]
  %v1653 = vld [vmem:[%s8 + $0x7c] sm:$0xf]
  %v1654 = vld [vmem:[%s9] sm:$0x1]
  %v1656 = vlaneseq
  %v1657 = vshrl.u32 %v1656, 7
  %v1658 = vsub.s32 0, %v1657
  %v1659 = vrot.slane %v1654, %v1658
  %v1693 = vunpack.c.l.b16 %v1622
  %v1694 = vunpack.c.l.b16 %v1623
  %v1695 = vunpack.c.l.b16 %v1624
  %v1696 = vunpack.c.l.b16 %v1625
  %v1697 = vunpack.c.l.b16 %v1626
  %v1698 = vunpack.c.l.b16 %v1627
  %v1699 = vunpack.c.l.b16 %v1628
  %v1700 = vunpack.c.l.b16 %v1629
  %v1701 = vunpack.c.l.b16 %v1630
  %v1702 = vunpack.c.l.b16 %v1631
  %v1703 = vunpack.c.l.b16 %v1632
  %v1704 = vunpack.c.l.b16 %v1633
  %v1705 = vunpack.c.l.b16 %v1634
  %v1706 = vunpack.c.l.b16 %v1635
  %v1707 = vunpack.c.l.b16 %v1636
  %v1708 = vunpack.c.l.b16 %v1637
  %v1709 = vunpack.c.l.b16 %v1638
  %v1710 = vunpack.c.l.b16 %v1639
  %v1711 = vunpack.c.l.b16 %v1640
  %v1712 = vunpack.c.l.b16 %v1641
  %v1713 = vunpack.c.l.b16 %v1642
  %v1714 = vunpack.c.l.b16 %v1643
  %v1715 = vunpack.c.l.b16 %v1644
  %v1716 = vunpack.c.l.b16 %v1645
  %v1717 = vunpack.c.l.b16 %v1646
  %v1718 = vunpack.c.l.b16 %v1647
  %v1719 = vunpack.c.l.b16 %v1648
  %v1720 = vunpack.c.l.b16 %v1649
  %v1721 = vunpack.c.l.b16 %v1650
  %v1722 = vunpack.c.l.b16 %v1651
  %v1723 = vunpack.c.l.b16 %v1652
  %v1724 = vunpack.c.l.b16 %v1653
  %v1725 = vpack.c.b16 %v1694, %v1693
  %v1726 = vpack.c.b16 %v1696, %v1695
  %v1727 = vpack.c.b16 %v1698, %v1697
  %v1728 = vpack.c.b16 %v1700, %v1699
  %v1729 = vpack.c.b16 %v1702, %v1701
  %v1730 = vpack.c.b16 %v1704, %v1703
  %v1731 = vpack.c.b16 %v1706, %v1705
  %v1732 = vpack.c.b16 %v1708, %v1707
  %v1733 = vpack.c.b16 %v1710, %v1709
  %v1734 = vpack.c.b16 %v1712, %v1711
  %v1735 = vpack.c.b16 %v1714, %v1713
  %v1736 = vpack.c.b16 %v1716, %v1715
  %v1737 = vpack.c.b16 %v1718, %v1717
  %v1738 = vpack.c.b16 %v1720, %v1719
  %v1739 = vpack.c.b16 %v1722, %v1721
  %v1740 = vpack.c.b16 %v1724, %v1723
  %1757 = vmatprep.subr.bf16.mxu0 0
  %1758 = vmatpush1.bf16.msra.mxu0 %v1725
  %1759 = vmatprep.subr.bf16.mxu0 0
  %1760 = vmatpush1.bf16.msra.mxu0 %v1726
  %1761 = vmatprep.subr.bf16.mxu0 0
  %1762 = vmatpush1.bf16.msra.mxu0 %v1727
  %1763 = vmatprep.subr.bf16.mxu0 0
  %1764 = vmatpush1.bf16.msra.mxu0 %v1728
  %1765 = vmatprep.subr.bf16.mxu0 0
  %1766 = vmatpush1.bf16.msra.mxu0 %v1729
  %1767 = vmatprep.subr.bf16.mxu0 0
  %1768 = vmatpush1.bf16.msra.mxu0 %v1730
  %1769 = vmatprep.subr.bf16.mxu0 0
  %1770 = vmatpush1.bf16.msra.mxu0 %v1731
  %1771 = vmatprep.subr.bf16.mxu0 0
  %1772 = vmatpush1.bf16.msra.mxu0 %v1732
  %1773 = vmatprep.subr.bf16.mxu0 0
  %1774 = vmatpush1.bf16.msra.mxu0 %v1733
  %1775 = vmatprep.subr.bf16.mxu0 0
  %1776 = vmatpush1.bf16.msra.mxu0 %v1734
  %1777 = vmatprep.subr.bf16.mxu0 0
  %1778 = vmatpush1.bf16.msra.mxu0 %v1735
  %1779 = vmatprep.subr.bf16.mxu0 0
  %1780 = vmatpush1.bf16.msra.mxu0 %v1736
  %1781 = vmatprep.subr.bf16.mxu0 0
  %1782 = vmatpush1.bf16.msra.mxu0 %v1737
  %1783 = vmatprep.subr.bf16.mxu0 0
  %1784 = vmatpush1.bf16.msra.mxu0 %v1738
  %1785 = vmatprep.subr.bf16.mxu0 0
  %1786 = vmatpush1.bf16.msra.mxu0 %v1739
  %1787 = vmatprep.subr.bf16.mxu0 0
  %1788 = vmatpush1.bf16.msra.mxu0 %v1740
  %1789 = vmatprep.mubr.bf16.mxu0 %v1621
  %1790 = vmatmul.mubr.bf16.gmra.mrb[0].mxu0 %v1620
  %v1791 = vpop.f32.mrb[0].mxu0
  %v1792 = vadd.f32 %v1659, %v1791
  %v1793 = vpop.f32.mrb[0].mxu0
  %v1794 = vpop.f32.mrb[0].mxu0
  %v1795 = vadd.f32 %v1659, %v1794
  %v1796 = vpop.f32.mrb[0].mxu0
  %1797 = vdwg.mxu0
  %1798 = vst [vmem:[%s10] sm:$0xff] %v1792
  %1799 = vst [vmem:[%s10 + $0x8] sm:$0xff] %v1795
  // Predicated region
  $region42: #{policy_forward.1} parent=0 // pred_check
    _
  $region43: #{policy_forward.1} parent=0 // pred_check_branch
    %1801 = sbr.rel (0) target = $region45
  $region44: #{policy_forward.1} parent=0 // pred_region
    _
  $region45: #{policy_forward.1} parent=0 // pred_fallthru
    _
  // Predicated region
  $region46: #{policy_forward.1} parent=0 // pred_check
    _
  $region47: #{policy_forward.1} parent=0 // pred_check_branch
    %1803 = sbr.rel (0) target = $region49
  $region48: #{policy_forward.1} parent=0 // pred_region
    _
  $region49: #{policy_forward.1} parent=0 // pred_fallthru
    _

</llo_original>
